<compile_context>
chip_gen: v7x
topology: tpu7x:2x2x1
jax: 0.10.0
libtpu: 0.0.40
codegen_flags: <defaults>
</compile_context>

<pallas_src>
import math
from functools import partial

import jax
import jax.numpy as jnp
from jax import lax
from jax.experimental import pallas as pl
from jax.experimental.pallas import tpu as pltpu

_EPS_BACKEND = 1e-6   # eps in parallel_stabilized_simple
_EPS_NORM = 1e-5      # eps of MultiHeadLayerNorm (group_norm)
_NEG_INIT = -1e30     # finite stand-in for -inf in the running row max


def _mlstm_cell_kernel(q_ref, k_ref, v_ref, csq_ref, gk_ref, o_ref,
                       m_scr, s_scr, acc_scr, *, head_chunk):
    # q_ref/k_ref/v_ref : (1, NH, T, DH)  (mm_dtype; sm_scale already folded into q)
    # csq_ref           : (1, NH, T, 1)   f32   cumsum(logsigmoid(f))[query rows]
    # gk_ref            : (1, NH, 1, T)   f32   igate[key] - cumsum(logsigmoid(f))[key]
    # o_ref             : (1, T, NH*DH)
    # scratch           : m_scr/s_scr (NH, T, 1) f32, acc_scr (NH, T, DH) f32
    qi = pl.program_id(1)
    ki = pl.program_id(2)
    nk = pl.num_programs(2)
    NH, TQ, DH = acc_scr.shape
    TK = k_ref.shape[2]
    HC = head_chunk

    @pl.when(ki == 0)
    def _init():
        m_scr[...] = jnp.full_like(m_scr, _NEG_INIT)
        s_scr[...] = jnp.zeros_like(s_scr)
        acc_scr[...] = jnp.zeros_like(acc_scr)

    def _block(masked):
        if masked:
            # diagonal block: local causal mask (qi == ki so offsets cancel)
            row = lax.broadcasted_iota(jnp.int32, (TQ, TK), 0)
            col = lax.broadcasted_iota(jnp.int32, (TQ, TK), 1)
            keep = (col <= row)[None, :, :]
        # head chunks bound the (hc, TQ, TK) f32 temporaries (spill control)
        for h0 in range(0, NH, HC):
            h1 = min(h0 + HC, NH)
            q = q_ref[0, h0:h1]                      # (hc, TQ, DH) mm_dtype
            k = k_ref[0, h0:h1]                      # (hc, TK, DH)
            v = v_ref[0, h0:h1]                      # (hc, TK, DH)
            csq = csq_ref[0, h0:h1]                  # (hc, TQ, 1) f32
            gk = gk_ref[0, h0:h1]                    # (hc, 1, TK) f32

            # log decay: log_D[h,i,j] = cs[h,i] - cs[h,j] + igate[h,j]
            log_d = csq + gk                         # (hc, TQ, TK)
            if masked:
                log_d = jnp.where(keep, log_d, -jnp.inf)

            m_prev = m_scr[h0:h1]                    # (hc, TQ, 1)
            m_new = jnp.maximum(m_prev, jnp.max(log_d, axis=-1, keepdims=True))
            d = jnp.exp(log_d - m_new)               # f32 (v5e-safe)

            qk = jnp.einsum('hqd,hkd->hqk', q, k,
                            preferred_element_type=jnp.float32)
            c = qk * d                               # (hc, TQ, TK) f32

            alpha = jnp.exp(m_prev - m_new)          # rescale previous blocks
            s_scr[h0:h1] = alpha * s_scr[h0:h1] + jnp.sum(c, axis=-1, keepdims=True)
            acc_scr[h0:h1] = alpha * acc_scr[h0:h1] + jnp.einsum(
                'hqk,hkd->hqd', c.astype(v.dtype), v,
                preferred_element_type=jnp.float32)
            m_scr[h0:h1] = m_new

    # causal mask only needed on the diagonal block; strictly-below-diagonal
    # blocks are all-true, strictly-above blocks are skipped (and their DMAs are
    # skipped too via the clamped index_maps in the wrapper).
    @pl.when(ki == qi)
    def _diag():
        _block(masked=True)

    @pl.when(ki < qi)
    def _off_diag():
        _block(masked=False)

    @pl.when(ki == nk - 1)
    def _finalize():
        m = m_scr[...]
        normalizer = jnp.maximum(jnp.abs(s_scr[...]), jnp.exp(-m))     # (NH, TQ, 1)
        # approx reciprocal is safe: the per-(head,token) scale is cancelled by the
        # per-head LayerNorm below (up to the tiny eps terms).
        inv = pl.reciprocal(normalizer + _EPS_BACKEND, approx=True)
        h = acc_scr[...] * inv                                         # (NH, TQ, DH)
        # MultiHeadLayerNorm core: per-token, per-head norm over DH (weight in wrapper)
        mean = jnp.mean(h, axis=-1, keepdims=True)
        var = jnp.mean((h - mean) ** 2, axis=-1, keepdims=True)
        hn = (h - mean) * lax.rsqrt(var + _EPS_NORM)                   # (NH, TQ, DH)
        # single lane-dense (TQ, NH*DH) store; channel order h*DH + d matches (B,S,E)
        slab = jnp.concatenate([hn[i] for i in range(NH)], axis=-1)
        o_ref[0] = slab.astype(o_ref.dtype)


def _default_max_seq_tile():
    kind = ""
    try:
        kind = jax.devices()[0].device_kind.lower()
    except Exception:
        pass
    # v6e: 2x256x256 MXU + 128 MiB VMEM -> T=256.  v5e (128-wide MXU) and v7x
    # (64 MiB VMEM/TC) -> T=128.
    return 256 if "v6" in kind else 128


def _pick_seq_tile(S, max_tile):
    for t in (max_tile, 128):
        if S % t == 0:
            return t
    return S


def init_mlstm_cell_params(key, embedding_dim, num_heads):
    """Deterministic init matching mLSTMCell.reset_parameters()."""
    return {
        # nn.Linear(3E, NH): weight zero-init, bias ~ N(0, 0.1)
        "igate_w": jnp.zeros((num_heads, 3 * embedding_dim), jnp.float32),
        "igate_b": 0.1 * jax.random.normal(key, (num_heads,), jnp.float32),
        # fgate: weight zero-init, bias = linspace(3.0, 6.0, NH)
        "fgate_w": jnp.zeros((num_heads, 3 * embedding_dim), jnp.float32),
        "fgate_b": jnp.linspace(3.0, 6.0, num_heads, dtype=jnp.float32),
        # MultiHeadLayerNorm: weight_proxy = ones, no bias
        "outnorm_w": jnp.ones((embedding_dim,), jnp.float32),
    }


def mlstm_cell_forward(params, q, k, v, num_heads, *,
                       mm_dtype=jnp.bfloat16, seq_tile=None, head_chunk=4,
                       vmem_limit_bytes=None):
    """Equivalent of mLSTMCell.forward with backend='parallel'."""
    B, S, E = q.shape
    NH = num_heads
    assert E % NH == 0
    DH = E // NH
    sm_scale = 1.0 / math.sqrt(DH)

    # --- tiny gate linears + log-sigmoid cumsum (plain-JAX glue; O(B*S*NH)) ---
    x = jnp.concatenate([q, k, v], axis=-1)                          # (B, S, 3E)
    ig_pre = (x @ params["igate_w"].T + params["igate_b"]).astype(jnp.float32)
    fg_pre = (x @ params["fgate_w"].T + params["fgate_b"]).astype(jnp.float32)
    log_fg = jax.nn.log_sigmoid(fg_pre)
    cs = jnp.cumsum(log_fg, axis=1)                                  # (B, S, NH)

    # head-major layouts; sm_scale folded into q and MXU-dtype cast ride the same copy
    qh = (jnp.transpose(q.reshape(B, S, NH, DH), (0, 2, 1, 3)) * sm_scale).astype(mm_dtype)
    kh = jnp.transpose(k.reshape(B, S, NH, DH), (0, 2, 1, 3)).astype(mm_dtype)
    vh = jnp.transpose(v.reshape(B, S, NH, DH), (0, 2, 1, 3)).astype(mm_dtype)
    cs_q = jnp.transpose(cs, (0, 2, 1))[:, :, :, None]               # (B, NH, S, 1)
    g_k = jnp.transpose(ig_pre - cs, (0, 2, 1))[:, :, None, :]       # (B, NH, 1, S)

    T = seq_tile if seq_tile is not None else _pick_seq_tile(S, _default_max_seq_tile())
    assert S % T == 0, f"sequence length {S} must be a multiple of tile {T}"
    nq = nk = S // T
    hc = max(1, min(head_chunk, NH))

    # Clamped key index: for ki > qi the block index does not change, so the
    # auto-pipelined K/V/gk DMA for fully-masked blocks is skipped.
    in_specs = [
        pl.BlockSpec((1, NH, T, DH), lambda b, i, j: (b, 0, i, 0)),                   # q
        pl.BlockSpec((1, NH, T, DH), lambda b, i, j: (b, 0, jnp.minimum(i, j), 0)),   # k
        pl.BlockSpec((1, NH, T, DH), lambda b, i, j: (b, 0, jnp.minimum(i, j), 0)),   # v
        pl.BlockSpec((1, NH, T, 1),  lambda b, i, j: (b, 0, i, 0)),                   # cs @ query rows
        pl.BlockSpec((1, NH, 1, T),  lambda b, i, j: (b, 0, 0, jnp.minimum(i, j))),   # ig - cs @ key cols
    ]
    out_specs = pl.BlockSpec((1, T, E), lambda b, i, j: (b, i, 0))   # lane-dense output slab

    mm_bytes = jnp.dtype(mm_dtype).itemsize
    cost = pl.CostEstimate(
        flops=int(2 * B * NH * S * S * DH),                  # 2 matmuls, causal half
        transcendentals=int(B * NH * S * S // 2 + B * NH * S),
        bytes_accessed=int(B * S * E * mm_bytes * (2 + nq)   # q once; k+v ~ (nq+1)/2 tiles each
                           + B * S * E * q.dtype.itemsize),  # output
    )

    kernel = partial(_mlstm_cell_kernel, head_chunk=hc)

    out = pl.pallas_call(
        kernel,
        out_shape=jax.ShapeDtypeStruct((B, S, E), q.dtype),
        grid=(B, nq, nk),
        in_specs=in_specs,
        out_specs=out_specs,
        scratch_shapes=[
            pltpu.VMEM((NH, T, 1), jnp.float32),    # running row max (m)
            pltpu.VMEM((NH, T, 1), jnp.float32),    # running row sum of C
            pltpu.VMEM((NH, T, DH), jnp.float32),   # running C @ V accumulator
        ],
        compiler_params=pltpu.CompilerParams(
            dimension_semantics=("parallel", "parallel", "arbitrary"),
            vmem_limit_bytes=vmem_limit_bytes),
        cost_estimate=cost,
    )(qh, kh, vh, cs_q, g_k)

    # per-channel MultiHeadLayerNorm weight (channel order h*DH + d matches (B, S, E))
    return out * params["outnorm_w"][None, None, :].astype(out.dtype)


def mlstm_cell_forward_ref(params, q, k, v, num_heads):
    """Plain-JAX reference (mirrors parallel_stabilized_simple + MultiHeadLayerNorm)."""
    B, S, E = q.shape
    NH = num_heads
    DH = E // NH
    x = jnp.concatenate([q, k, v], axis=-1)
    ig = x @ params["igate_w"].T + params["igate_b"]
    fg = x @ params["fgate_w"].T + params["fgate_b"]
    qh = jnp.transpose(q.reshape(B, S, NH, DH), (0, 2, 1, 3))
    kh = jnp.transpose(k.reshape(B, S, NH, DH), (0, 2, 1, 3))
    vh = jnp.transpose(v.reshape(B, S, NH, DH), (0, 2, 1, 3))
    ig = jnp.transpose(ig, (0, 2, 1))[..., None]                          # (B,NH,S,1)
    fg = jnp.transpose(fg, (0, 2, 1))[..., None]
    log_fg = jax.nn.log_sigmoid(fg)
    cs = jnp.cumsum(log_fg, axis=-2)                                      # (B,NH,S,1)
    mat = cs - jnp.swapaxes(cs, -1, -2)                                   # (B,NH,S,S)
    mask = jnp.tril(jnp.ones((S, S), bool))
    log_d = jnp.where(mask, mat + jnp.swapaxes(ig, -1, -2), -jnp.inf)
    max_log_d = jnp.max(log_d, axis=-1, keepdims=True)
    d_mat = jnp.exp(log_d - max_log_d)
    qk = (qh @ jnp.swapaxes(kh, -1, -2)) / math.sqrt(DH)
    c_mat = qk * d_mat
    normalizer = jnp.maximum(jnp.abs(jnp.sum(c_mat, -1, keepdims=True)),
                             jnp.exp(-max_log_d))
    c_norm = c_mat / (normalizer + _EPS_BACKEND)
    h = c_norm @ vh
    mean = jnp.mean(h, -1, keepdims=True)
    var = jnp.mean((h - mean) ** 2, -1, keepdims=True)
    hn = (h - mean) / jnp.sqrt(var + _EPS_NORM)
    hn = hn * params["outnorm_w"].reshape(1, NH, 1, DH)
    return jnp.transpose(hn, (0, 2, 1, 3)).reshape(B, S, E)


if __name__ == "__main__":
    B, S, NH, DH = 2, 16, 2, 32
    E = NH * DH                                   # embedding_dim = 64

    key = jax.random.PRNGKey(0)
    kp, kq, kk, kv = jax.random.split(key, 4)
    params = init_mlstm_cell_params(kp, E, NH)
    q = jax.random.normal(kq, (B, S, E), jnp.float32)
    k = jax.random.normal(kk, (B, S, E), jnp.float32)
    v = jax.random.normal(kv, (B, S, E), jnp.float32)

    ref = mlstm_cell_forward_ref(params, q, k, v, NH)

    # Exact-precision path: proves the kernel math against the pure-JAX reference.
    out_f32 = mlstm_cell_forward(params, q, k, v, NH, mm_dtype=jnp.float32)
    out_f32 = jax.block_until_ready(out_f32)
    assert out_f32.shape == (B, S, E), out_f32.shape
    assert bool(jnp.all(jnp.isfinite(out_f32)))
    err_f32 = float(jnp.max(jnp.abs(out_f32 - ref)))
    assert err_f32 < 2e-4, f"f32 kernel mismatch vs reference: {err_f32}"

    # Production path: bf16 MXU operands with f32 accumulation (default).
    out_bf16 = mlstm_cell_forward(params, q, k, v, NH)
    out_bf16 = jax.block_until_ready(out_bf16)
    assert bool(jnp.all(jnp.isfinite(out_bf16)))
    err_bf16 = float(jnp.max(jnp.abs(out_bf16 - ref)))
    err_bf16_mean = float(jnp.mean(jnp.abs(out_bf16 - ref)))
    assert err_bf16 < 1.5e-1, f"bf16 kernel max mismatch vs reference: {err_bf16}"
    assert err_bf16_mean < 2e-2, f"bf16 kernel mean mismatch vs reference: {err_bf16_mean}"

    print("KERNEL_OK")
</pallas_src>

<mosaic_0001>
module attributes {stable_mosaic.version = 11 : i64} {
  func.func @_mlstm_cell_kernel(%arg0: i32, %arg1: i32, %arg2: i32, %arg3: memref<1x2x16x32xf32, #tpu.memory_space<vmem>>, %arg4: memref<1x2x16x32xf32, #tpu.memory_space<vmem>>, %arg5: memref<1x2x16x32xf32, #tpu.memory_space<vmem>>, %arg6: memref<1x2x16x1xf32, #tpu.memory_space<vmem>>, %arg7: memref<1x2x1x16xf32, #tpu.memory_space<vmem>>, %arg8: memref<1x16x64xf32, #tpu.memory_space<vmem>>, %arg9: memref<2x16x1xf32, #tpu.memory_space<vmem>>, %arg10: memref<2x16x1xf32, #tpu.memory_space<vmem>>, %arg11: memref<2x16x32xf32, #tpu.memory_space<vmem>>) attributes {dimension_semantics = [#tpu.dimension_semantics<parallel>, #tpu.dimension_semantics<parallel>, #tpu.dimension_semantics<arbitrary>], iteration_bounds = array<i64: 2, 1, 1>, scalar_prefetch = 0 : i64, scratch_operands = 3 : i64, tpu.core_type = #tpu.core_type<tc>, window_params = [{transform_indices = @transform_0, window_bounds = array<i64: 1, 2, 16, 32>}, {transform_indices = @transform_1, window_bounds = array<i64: 1, 2, 16, 32>}, {transform_indices = @transform_2, window_bounds = array<i64: 1, 2, 16, 32>}, {transform_indices = @transform_3, window_bounds = array<i64: 1, 2, 16, 1>}, {transform_indices = @transform_4, window_bounds = array<i64: 1, 2, 1, 16>}, {transform_indices = @transform_5, window_bounds = array<i64: 1, 16, 64>}]} {
    %c0_i32 = arith.constant 0 : i32
    %0 = arith.cmpi eq, %arg2, %c0_i32 : i32
    %1 = arith.extui %0 : i1 to i32
    %c0_i32_0 = arith.constant 0 : i32
    %2 = arith.cmpi ne, %1, %c0_i32_0 : i32
    scf.if %2 {
      %cst = arith.constant -1.000000e+30 : f32
      %12 = vector.broadcast %cst : f32 to vector<2x16x1xf32>
      %c0 = arith.constant 0 : index
      %c0_5 = arith.constant 0 : index
      %c0_6 = arith.constant 0 : index
      %13 = vector.load %arg9[%c0, %c0_5, %c0_6] : memref<2x16x1xf32, #tpu.memory_space<vmem>>, vector<2x16x1xf32>
      tpu.vector_store %arg9[%c0, %c0_5, %c0_6], %12 {strides = array<i32>} : memref<2x16x1xf32, #tpu.memory_space<vmem>>, vector<2x16x1xf32>,
      %cst_7 = arith.constant 0.000000e+00 : f32
      %14 = vector.broadcast %cst_7 : f32 to vector<2x16x1xf32>
      %c0_8 = arith.constant 0 : index
      %c0_9 = arith.constant 0 : index
      %c0_10 = arith.constant 0 : index
      %15 = vector.load %arg10[%c0_8, %c0_9, %c0_10] : memref<2x16x1xf32, #tpu.memory_space<vmem>>, vector<2x16x1xf32>
      tpu.vector_store %arg10[%c0_8, %c0_9, %c0_10], %14 {strides = array<i32>} : memref<2x16x1xf32, #tpu.memory_space<vmem>>, vector<2x16x1xf32>,
      %cst_11 = arith.constant 0.000000e+00 : f32
      %16 = vector.broadcast %cst_11 : f32 to vector<2x16x32xf32>
      %c0_12 = arith.constant 0 : index
      %c0_13 = arith.constant 0 : index
      %c0_14 = arith.constant 0 : index
      %17 = vector.load %arg11[%c0_12, %c0_13, %c0_14] : memref<2x16x32xf32, #tpu.memory_space<vmem>>, vector<2x16x32xf32>
      tpu.vector_store %arg11[%c0_12, %c0_13, %c0_14], %16 {strides = array<i32>} : memref<2x16x32xf32, #tpu.memory_space<vmem>>, vector<2x16x32xf32>,
    } else {
    }
    %3 = arith.cmpi eq, %arg2, %arg1 : i32
    %4 = arith.extui %3 : i1 to i32
    %c0_i32_1 = arith.constant 0 : i32
    %5 = arith.cmpi ne, %4, %c0_i32_1 : i32
    scf.if %5 {
      %12 = tpu.iota {dimensions = array<i32: 0>} : vector<16x16xi32>
      %13 = tpu.iota {dimensions = array<i32: 1>} : vector<16x16xi32>
      %14 = arith.cmpi sle, %13, %12 : vector<16x16xi32>
      %15 = vector.shape_cast %14 : vector<16x16xi1> to vector<1x16x16xi1>
      %c0 = arith.constant 0 : index
      %c0_5 = arith.constant 0 : index
      %c0_6 = arith.constant 0 : index
      %c0_7 = arith.constant 0 : index
      %16 = vector.load %arg3[%c0, %c0_5, %c0_6, %c0_7] : memref<1x2x16x32xf32, #tpu.memory_space<vmem>>, vector<1x2x16x32xf32>
      %17 = vector.shape_cast %16 : vector<1x2x16x32xf32> to vector<2x16x32xf32>
      %c0_8 = arith.constant 0 : index
      %c0_9 = arith.constant 0 : index
      %c0_10 = arith.constant 0 : index
      %c0_11 = arith.constant 0 : index
      %18 = vector.load %arg4[%c0_8, %c0_9, %c0_10, %c0_11] : memref<1x2x16x32xf32, #tpu.memory_space<vmem>>, vector<1x2x16x32xf32>
      %19 = vector.shape_cast %18 : vector<1x2x16x32xf32> to vector<2x16x32xf32>
      %c0_12 = arith.constant 0 : index
      %c0_13 = arith.constant 0 : index
      %c0_14 = arith.constant 0 : index
      %c0_15 = arith.constant 0 : index
      %20 = vector.load %arg5[%c0_12, %c0_13, %c0_14, %c0_15] : memref<1x2x16x32xf32, #tpu.memory_space<vmem>>, vector<1x2x16x32xf32>
      %21 = vector.shape_cast %20 : vector<1x2x16x32xf32> to vector<2x16x32xf32>
      %c0_16 = arith.constant 0 : index
      %c0_17 = arith.constant 0 : index
      %c0_18 = arith.constant 0 : index
      %c0_19 = arith.constant 0 : index
      %22 = vector.load %arg6[%c0_16, %c0_17, %c0_18, %c0_19] : memref<1x2x16x1xf32, #tpu.memory_space<vmem>>, vector<1x2x16x1xf32>
      %23 = vector.shape_cast %22 : vector<1x2x16x1xf32> to vector<2x16x1xf32>
      %c0_20 = arith.constant 0 : index
      %c0_21 = arith.constant 0 : index
      %c0_22 = arith.constant 0 : index
      %c0_23 = arith.constant 0 : index
      %24 = vector.load %arg7[%c0_20, %c0_21, %c0_22, %c0_23] : memref<1x2x1x16xf32, #tpu.memory_space<vmem>>, vector<1x2x1x16xf32>
      %25 = vector.shape_cast %24 : vector<1x2x1x16xf32> to vector<2x1x16xf32>
      %26 = vector.broadcast %23 : vector<2x16x1xf32> to vector<2x16x16xf32>
      %27 = vector.broadcast %25 : vector<2x1x16xf32> to vector<2x16x16xf32>
      %28 = arith.addf %26, %27 : vector<2x16x16xf32>
      %cst = arith.constant 0xFF800000 : f32
      %29 = vector.shape_cast %15 : vector<1x16x16xi1> to vector<1x16x16xi1>
      %30 = vector.broadcast %29 : vector<1x16x16xi1> to vector<2x16x16xi1>
      %31 = vector.broadcast %cst : f32 to vector<2x16x16xf32>
      %32 = arith.select %30, %28, %31 : vector<2x16x16xi1>, vector<2x16x16xf32>
      %c0_24 = arith.constant 0 : index
      %c0_25 = arith.constant 0 : index
      %c0_26 = arith.constant 0 : index
      %33 = vector.load %arg9[%c0_24, %c0_25, %c0_26] : memref<2x16x1xf32, #tpu.memory_space<vmem>>, vector<2x16x1xf32>
      %cst_27 = arith.constant dense<0xFF800000> : vector<2x16xf32>
      %34 = vector.multi_reduction <maximumf>, %32, %cst_27 [2] : vector<2x16x16xf32> to vector<2x16xf32>
      %35 = vector.shape_cast %34 : vector<2x16xf32> to vector<2x16x1xf32>
      %36 = arith.maximumf %33, %35 : vector<2x16x1xf32>
      %37 = vector.broadcast %36 : vector<2x16x1xf32> to vector<2x16x16xf32>
      %38 = arith.subf %32, %37 : vector<2x16x16xf32>
      %39 = math.exp %38 : vector<2x16x16xf32>
      "tpu.trace_start"() <{level = 10 : i32, message = "hqd,hkd->hqk"}> : () -> ()
      %cst_28 = arith.constant dense<0.000000e+00> : vector<2x16x16xf32>
      %40 = tpu.matmul %17, %19, %cst_28 {dimension_numbers = #tpu.dot_dimension_numbers<[2], [2], [1], [1], [0, 0, 0, 1, 1, 1], [0], [0]>} : vector<2x16x32xf32>, vector<2x16x32xf32>, vector<2x16x16xf32> -> vector<2x16x16xf32>
      "tpu.trace_stop"() : () -> ()
      %41 = arith.mulf %40, %39 : vector<2x16x16xf32>
      %42 = arith.subf %33, %36 : vector<2x16x1xf32>
      %43 = math.exp %42 : vector<2x16x1xf32>
      %c0_29 = arith.constant 0 : index
      %c0_30 = arith.constant 0 : index
      %c0_31 = arith.constant 0 : index
      %44 = vector.load %arg10[%c0_29, %c0_30, %c0_31] : memref<2x16x1xf32, #tpu.memory_space<vmem>>, vector<2x16x1xf32>
      %45 = arith.mulf %43, %44 : vector<2x16x1xf32>
      %cst_32 = arith.constant dense<0.000000e+00> : vector<2x16xf32>
      %46 = vector.multi_reduction <add>, %41, %cst_32 [2] : vector<2x16x16xf32> to vector<2x16xf32>
      %47 = vector.shape_cast %46 : vector<2x16xf32> to vector<2x16x1xf32>
      %48 = arith.addf %45, %47 : vector<2x16x1xf32>
      %c0_33 = arith.constant 0 : index
      %c0_34 = arith.constant 0 : index
      %c0_35 = arith.constant 0 : index
      %49 = vector.load %arg10[%c0_33, %c0_34, %c0_35] : memref<2x16x1xf32, #tpu.memory_space<vmem>>, vector<2x16x1xf32>
      tpu.vector_store %arg10[%c0_33, %c0_34, %c0_35], %48 {strides = array<i32>} : memref<2x16x1xf32, #tpu.memory_space<vmem>>, vector<2x16x1xf32>,
      %c0_36 = arith.constant 0 : index
      %c0_37 = arith.constant 0 : index
      %c0_38 = arith.constant 0 : index
      %50 = vector.load %arg11[%c0_36, %c0_37, %c0_38] : memref<2x16x32xf32, #tpu.memory_space<vmem>>, vector<2x16x32xf32>
      %51 = vector.broadcast %43 : vector<2x16x1xf32> to vector<2x16x32xf32>
      %52 = arith.mulf %51, %50 : vector<2x16x32xf32>
      "tpu.trace_start"() <{level = 10 : i32, message = "hqk,hkd->hqd"}> : () -> ()
      %cst_39 = arith.constant dense<0.000000e+00> : vector<2x16x32xf32>
      %53 = tpu.matmul %41, %21, %cst_39 {dimension_numbers = #tpu.dot_dimension_numbers<[2], [1], [1], [2], [0, 0, 0, 1, 1, 2], [0], [0]>} : vector<2x16x16xf32>, vector<2x16x32xf32>, vector<2x16x32xf32> -> vector<2x16x32xf32>
      "tpu.trace_stop"() : () -> ()
      %54 = arith.addf %52, %53 : vector<2x16x32xf32>
      %c0_40 = arith.constant 0 : index
      %c0_41 = arith.constant 0 : index
      %c0_42 = arith.constant 0 : index
      %55 = vector.load %arg11[%c0_40, %c0_41, %c0_42] : memref<2x16x32xf32, #tpu.memory_space<vmem>>, vector<2x16x32xf32>
      tpu.vector_store %arg11[%c0_40, %c0_41, %c0_42], %54 {strides = array<i32>} : memref<2x16x32xf32, #tpu.memory_space<vmem>>, vector<2x16x32xf32>,
      %c0_43 = arith.constant 0 : index
      %c0_44 = arith.constant 0 : index
      %c0_45 = arith.constant 0 : index
      %56 = vector.load %arg9[%c0_43, %c0_44, %c0_45] : memref<2x16x1xf32, #tpu.memory_space<vmem>>, vector<2x16x1xf32>
      tpu.vector_store %arg9[%c0_43, %c0_44, %c0_45], %36 {strides = array<i32>} : memref<2x16x1xf32, #tpu.memory_space<vmem>>, vector<2x16x1xf32>,
    } else {
    }
    %6 = arith.cmpi slt, %arg2, %arg1 : i32
    %7 = arith.extui %6 : i1 to i32
    %c0_i32_2 = arith.constant 0 : i32
    %8 = arith.cmpi ne, %7, %c0_i32_2 : i32
    scf.if %8 {
      %c0 = arith.constant 0 : index
      %c0_5 = arith.constant 0 : index
      %c0_6 = arith.constant 0 : index
      %c0_7 = arith.constant 0 : index
      %12 = vector.load %arg3[%c0, %c0_5, %c0_6, %c0_7] : memref<1x2x16x32xf32, #tpu.memory_space<vmem>>, vector<1x2x16x32xf32>
      %13 = vector.shape_cast %12 : vector<1x2x16x32xf32> to vector<2x16x32xf32>
      %c0_8 = arith.constant 0 : index
      %c0_9 = arith.constant 0 : index
      %c0_10 = arith.constant 0 : index
      %c0_11 = arith.constant 0 : index
      %14 = vector.load %arg4[%c0_8, %c0_9, %c0_10, %c0_11] : memref<1x2x16x32xf32, #tpu.memory_space<vmem>>, vector<1x2x16x32xf32>
      %15 = vector.shape_cast %14 : vector<1x2x16x32xf32> to vector<2x16x32xf32>
      %c0_12 = arith.constant 0 : index
      %c0_13 = arith.constant 0 : index
      %c0_14 = arith.constant 0 : index
      %c0_15 = arith.constant 0 : index
      %16 = vector.load %arg5[%c0_12, %c0_13, %c0_14, %c0_15] : memref<1x2x16x32xf32, #tpu.memory_space<vmem>>, vector<1x2x16x32xf32>
      %17 = vector.shape_cast %16 : vector<1x2x16x32xf32> to vector<2x16x32xf32>
      %c0_16 = arith.constant 0 : index
      %c0_17 = arith.constant 0 : index
      %c0_18 = arith.constant 0 : index
      %c0_19 = arith.constant 0 : index
      %18 = vector.load %arg6[%c0_16, %c0_17, %c0_18, %c0_19] : memref<1x2x16x1xf32, #tpu.memory_space<vmem>>, vector<1x2x16x1xf32>
      %19 = vector.shape_cast %18 : vector<1x2x16x1xf32> to vector<2x16x1xf32>
      %c0_20 = arith.constant 0 : index
      %c0_21 = arith.constant 0 : index
      %c0_22 = arith.constant 0 : index
      %c0_23 = arith.constant 0 : index
      %20 = vector.load %arg7[%c0_20, %c0_21, %c0_22, %c0_23] : memref<1x2x1x16xf32, #tpu.memory_space<vmem>>, vector<1x2x1x16xf32>
      %21 = vector.shape_cast %20 : vector<1x2x1x16xf32> to vector<2x1x16xf32>
      %22 = vector.broadcast %19 : vector<2x16x1xf32> to vector<2x16x16xf32>
      %23 = vector.broadcast %21 : vector<2x1x16xf32> to vector<2x16x16xf32>
      %24 = arith.addf %22, %23 : vector<2x16x16xf32>
      %c0_24 = arith.constant 0 : index
      %c0_25 = arith.constant 0 : index
      %c0_26 = arith.constant 0 : index
      %25 = vector.load %arg9[%c0_24, %c0_25, %c0_26] : memref<2x16x1xf32, #tpu.memory_space<vmem>>, vector<2x16x1xf32>
      %cst = arith.constant dense<0xFF800000> : vector<2x16xf32>
      %26 = vector.multi_reduction <maximumf>, %24, %cst [2] : vector<2x16x16xf32> to vector<2x16xf32>
      %27 = vector.shape_cast %26 : vector<2x16xf32> to vector<2x16x1xf32>
      %28 = arith.maximumf %25, %27 : vector<2x16x1xf32>
      %29 = vector.broadcast %28 : vector<2x16x1xf32> to vector<2x16x16xf32>
      %30 = arith.subf %24, %29 : vector<2x16x16xf32>
      %31 = math.exp %30 : vector<2x16x16xf32>
      "tpu.trace_start"() <{level = 10 : i32, message = "hqd,hkd->hqk"}> : () -> ()
      %cst_27 = arith.constant dense<0.000000e+00> : vector<2x16x16xf32>
      %32 = tpu.matmul %13, %15, %cst_27 {dimension_numbers = #tpu.dot_dimension_numbers<[2], [2], [1], [1], [0, 0, 0, 1, 1, 1], [0], [0]>} : vector<2x16x32xf32>, vector<2x16x32xf32>, vector<2x16x16xf32> -> vector<2x16x16xf32>
      "tpu.trace_stop"() : () -> ()
      %33 = arith.mulf %32, %31 : vector<2x16x16xf32>
      %34 = arith.subf %25, %28 : vector<2x16x1xf32>
      %35 = math.exp %34 : vector<2x16x1xf32>
      %c0_28 = arith.constant 0 : index
      %c0_29 = arith.constant 0 : index
      %c0_30 = arith.constant 0 : index
      %36 = vector.load %arg10[%c0_28, %c0_29, %c0_30] : memref<2x16x1xf32, #tpu.memory_space<vmem>>, vector<2x16x1xf32>
      %37 = arith.mulf %35, %36 : vector<2x16x1xf32>
      %cst_31 = arith.constant dense<0.000000e+00> : vector<2x16xf32>
      %38 = vector.multi_reduction <add>, %33, %cst_31 [2] : vector<2x16x16xf32> to vector<2x16xf32>
      %39 = vector.shape_cast %38 : vector<2x16xf32> to vector<2x16x1xf32>
      %40 = arith.addf %37, %39 : vector<2x16x1xf32>
      %c0_32 = arith.constant 0 : index
      %c0_33 = arith.constant 0 : index
      %c0_34 = arith.constant 0 : index
      %41 = vector.load %arg10[%c0_32, %c0_33, %c0_34] : memref<2x16x1xf32, #tpu.memory_space<vmem>>, vector<2x16x1xf32>
      tpu.vector_store %arg10[%c0_32, %c0_33, %c0_34], %40 {strides = array<i32>} : memref<2x16x1xf32, #tpu.memory_space<vmem>>, vector<2x16x1xf32>,
      %c0_35 = arith.constant 0 : index
      %c0_36 = arith.constant 0 : index
      %c0_37 = arith.constant 0 : index
      %42 = vector.load %arg11[%c0_35, %c0_36, %c0_37] : memref<2x16x32xf32, #tpu.memory_space<vmem>>, vector<2x16x32xf32>
      %43 = vector.broadcast %35 : vector<2x16x1xf32> to vector<2x16x32xf32>
      %44 = arith.mulf %43, %42 : vector<2x16x32xf32>
      "tpu.trace_start"() <{level = 10 : i32, message = "hqk,hkd->hqd"}> : () -> ()
      %cst_38 = arith.constant dense<0.000000e+00> : vector<2x16x32xf32>
      %45 = tpu.matmul %33, %17, %cst_38 {dimension_numbers = #tpu.dot_dimension_numbers<[2], [1], [1], [2], [0, 0, 0, 1, 1, 2], [0], [0]>} : vector<2x16x16xf32>, vector<2x16x32xf32>, vector<2x16x32xf32> -> vector<2x16x32xf32>
      "tpu.trace_stop"() : () -> ()
      %46 = arith.addf %44, %45 : vector<2x16x32xf32>
      %c0_39 = arith.constant 0 : index
      %c0_40 = arith.constant 0 : index
      %c0_41 = arith.constant 0 : index
      %47 = vector.load %arg11[%c0_39, %c0_40, %c0_41] : memref<2x16x32xf32, #tpu.memory_space<vmem>>, vector<2x16x32xf32>
      tpu.vector_store %arg11[%c0_39, %c0_40, %c0_41], %46 {strides = array<i32>} : memref<2x16x32xf32, #tpu.memory_space<vmem>>, vector<2x16x32xf32>,
      %c0_42 = arith.constant 0 : index
      %c0_43 = arith.constant 0 : index
      %c0_44 = arith.constant 0 : index
      %48 = vector.load %arg9[%c0_42, %c0_43, %c0_44] : memref<2x16x1xf32, #tpu.memory_space<vmem>>, vector<2x16x1xf32>
      tpu.vector_store %arg9[%c0_42, %c0_43, %c0_44], %28 {strides = array<i32>} : memref<2x16x1xf32, #tpu.memory_space<vmem>>, vector<2x16x1xf32>,
    } else {
    }
    %c0_i32_3 = arith.constant 0 : i32
    %9 = arith.cmpi eq, %arg2, %c0_i32_3 : i32
    %10 = arith.extui %9 : i1 to i32
    %c0_i32_4 = arith.constant 0 : i32
    %11 = arith.cmpi ne, %10, %c0_i32_4 : i32
    scf.if %11 {
      %c0 = arith.constant 0 : index
      %c0_5 = arith.constant 0 : index
      %c0_6 = arith.constant 0 : index
      %12 = vector.load %arg9[%c0, %c0_5, %c0_6] : memref<2x16x1xf32, #tpu.memory_space<vmem>>, vector<2x16x1xf32>
      %c0_7 = arith.constant 0 : index
      %c0_8 = arith.constant 0 : index
      %c0_9 = arith.constant 0 : index
      %13 = vector.load %arg10[%c0_7, %c0_8, %c0_9] : memref<2x16x1xf32, #tpu.memory_space<vmem>>, vector<2x16x1xf32>
      %14 = math.absf %13 : vector<2x16x1xf32>
      %cst = arith.constant 0.000000e+00 : f32
      %15 = vector.broadcast %cst : f32 to vector<2x16x1xf32>
      %16 = arith.subf %15, %12 : vector<2x16x1xf32>
      %17 = math.exp %16 : vector<2x16x1xf32>
      %18 = arith.maximumf %14, %17 : vector<2x16x1xf32>
      %cst_10 = arith.constant 9.99999997E-7 : f32
      %19 = vector.broadcast %cst_10 : f32 to vector<2x16x1xf32>
      %20 = arith.addf %18, %19 : vector<2x16x1xf32>
      %21 = tpu.reciprocal %20 {approx = true} : vector<2x16x1xf32> -> vector<2x16x1xf32>
      %c0_11 = arith.constant 0 : index
      %c0_12 = arith.constant 0 : index
      %c0_13 = arith.constant 0 : index
      %22 = vector.load %arg11[%c0_11, %c0_12, %c0_13] : memref<2x16x32xf32, #tpu.memory_space<vmem>>, vector<2x16x32xf32>
      %23 = vector.broadcast %21 : vector<2x16x1xf32> to vector<2x16x32xf32>
      %24 = arith.mulf %22, %23 : vector<2x16x32xf32>
      %cst_14 = arith.constant dense<0.000000e+00> : vector<2x16xf32>
      %25 = vector.multi_reduction <add>, %24, %cst_14 [2] : vector<2x16x32xf32> to vector<2x16xf32>
      %26 = vector.shape_cast %25 : vector<2x16xf32> to vector<2x16x1xf32>
      %cst_15 = arith.constant 3.200000e+01 : f32
      %27 = vector.broadcast %cst_15 : f32 to vector<2x16x1xf32>
      %28 = arith.divf %26, %27 : vector<2x16x1xf32>
      %29 = vector.broadcast %28 : vector<2x16x1xf32> to vector<2x16x32xf32>
      %30 = arith.subf %24, %29 : vector<2x16x32xf32>
      %31 = arith.mulf %30, %30 : vector<2x16x32xf32>
      %cst_16 = arith.constant dense<0.000000e+00> : vector<2x16xf32>
      %32 = vector.multi_reduction <add>, %31, %cst_16 [2] : vector<2x16x32xf32> to vector<2x16xf32>
      %33 = vector.shape_cast %32 : vector<2x16xf32> to vector<2x16x1xf32>
      %cst_17 = arith.constant 3.200000e+01 : f32
      %34 = vector.broadcast %cst_17 : f32 to vector<2x16x1xf32>
      %35 = arith.divf %33, %34 : vector<2x16x1xf32>
      %36 = vector.broadcast %28 : vector<2x16x1xf32> to vector<2x16x32xf32>
      %37 = arith.subf %24, %36 : vector<2x16x32xf32>
      %cst_18 = arith.constant 9.99999974E-6 : f32
      %38 = vector.broadcast %cst_18 : f32 to vector<2x16x1xf32>
      %39 = arith.addf %35, %38 : vector<2x16x1xf32>
      %40 = math.rsqrt %39 : vector<2x16x1xf32>
      %41 = vector.broadcast %40 : vector<2x16x1xf32> to vector<2x16x32xf32>
      %42 = arith.mulf %37, %41 : vector<2x16x32xf32>
      %43 = vector.extract_strided_slice %42 {offsets = [0, 0, 0], sizes = [1, 16, 32], strides = [1, 1, 1]} : vector<2x16x32xf32> to vector<1x16x32xf32>
      %44 = vector.shape_cast %43 : vector<1x16x32xf32> to vector<16x32xf32>
      %45 = vector.extract_strided_slice %42 {offsets = [1, 0, 0], sizes = [1, 16, 32], strides = [1, 1, 1]} : vector<2x16x32xf32> to vector<1x16x32xf32>
      %46 = vector.shape_cast %45 : vector<1x16x32xf32> to vector<16x32xf32>
      %47 = tpu.concatenate %44, %46 in 1 : vector<16x32xf32>, vector<16x32xf32> -> vector<16x64xf32>
      %c0_19 = arith.constant 0 : index
      %c0_20 = arith.constant 0 : index
      %c0_21 = arith.constant 0 : index
      %48 = vector.load %arg8[%c0_19, %c0_20, %c0_21] : memref<1x16x64xf32, #tpu.memory_space<vmem>>, vector<1x16x64xf32>
      %49 = vector.shape_cast %48 : vector<1x16x64xf32> to vector<16x64xf32>
      %50 = vector.shape_cast %47 : vector<16x64xf32> to vector<1x16x64xf32>
      tpu.vector_store %arg8[%c0_19, %c0_20, %c0_21], %50 {strides = array<i32>} : memref<1x16x64xf32, #tpu.memory_space<vmem>>, vector<1x16x64xf32>,
    } else {
    }
    return
  }
  func.func @transform_0(%arg0: i32, %arg1: i32, %arg2: i32) -> (i32, i32, i32, i32) {
    %c0_i32 = arith.constant 0 : i32
    %c0_i32_0 = arith.constant 0 : i32
    %c0_i32_1 = arith.constant 0 : i32
    return %arg0, %c0_i32, %arg1, %c0_i32_0 : i32, i32, i32, i32
  }
  func.func @transform_1(%arg0: i32, %arg1: i32, %arg2: i32) -> (i32, i32, i32, i32) {
    %0 = arith.minsi %arg1, %arg2 : i32
    %c0_i32 = arith.constant 0 : i32
    %c0_i32_0 = arith.constant 0 : i32
    %c0_i32_1 = arith.constant 0 : i32
    return %arg0, %c0_i32, %0, %c0_i32_0 : i32, i32, i32, i32
  }
  func.func @transform_2(%arg0: i32, %arg1: i32, %arg2: i32) -> (i32, i32, i32, i32) {
    %0 = arith.minsi %arg1, %arg2 : i32
    %c0_i32 = arith.constant 0 : i32
    %c0_i32_0 = arith.constant 0 : i32
    %c0_i32_1 = arith.constant 0 : i32
    return %arg0, %c0_i32, %0, %c0_i32_0 : i32, i32, i32, i32
  }
  func.func @transform_3(%arg0: i32, %arg1: i32, %arg2: i32) -> (i32, i32, i32, i32) {
    %c0_i32 = arith.constant 0 : i32
    %c0_i32_0 = arith.constant 0 : i32
    %c0_i32_1 = arith.constant 0 : i32
    return %arg0, %c0_i32, %arg1, %c0_i32_0 : i32, i32, i32, i32
  }
  func.func @transform_4(%arg0: i32, %arg1: i32, %arg2: i32) -> (i32, i32, i32, i32) {
    %0 = arith.minsi %arg1, %arg2 : i32
    %c0_i32 = arith.constant 0 : i32
    %c0_i32_0 = arith.constant 0 : i32
    %c0_i32_1 = arith.constant 0 : i32
    return %arg0, %c0_i32, %c0_i32_0, %0 : i32, i32, i32, i32
  }
  func.func @transform_5(%arg0: i32, %arg1: i32, %arg2: i32) -> (i32, i32, i32) {
    %c0_i32 = arith.constant 0 : i32
    %c0_i32_0 = arith.constant 0 : i32
    return %arg0, %arg1, %c0_i32 : i32, i32, i32
  }
}

</mosaic_0001>

<llo_original>
// kernel: tpu_custom_call.1
$region0: #{tpu_custom_call.1}
  #allocation0 [shape = 'u32[]', space=smem, size = 0x4, offset = 0x4, fixed_abs, tag = 'smem constant byte address 0x4 - core index']
  #allocation1 [shape = 'u32[144,128]{1,0:T(1,128)}', space=vmem, size = 0x12000, scoped, tag = 'internal scratch']
  #allocation2 [shape = 'f32[2,16,1]{2,1,0:T(8,128)}', space=vmem, size = 0x4000, scoped, tag = 'scratch operand']
  #allocation3 [shape = 'f32[2,16,1]{2,1,0:T(8,128)}', space=vmem, size = 0x4000, scoped, tag = 'scratch operand']
  #allocation4 [shape = 'f32[2,16,32]{2,1,0:T(8,128)}', space=vmem, size = 0x4000, scoped, tag = 'scratch operand']
  %s0 = inlined_call_operand.vmem [shape: f32[2,2,16,32], index: 0, kind: input, shape index: {}]
  %s1 = inlined_call_operand.hbm [shape: f32[2,2,16,32], index: 1, kind: input, shape index: {}]
  %s2 = inlined_call_operand.hbm [shape: f32[2,2,16,32], index: 2, kind: input, shape index: {}]
  %s3 = inlined_call_operand.vmem [shape: f32[2,2,16,1], index: 3, kind: input, shape index: {}]
  %s4 = inlined_call_operand.vmem [shape: f32[2,2,1,16], index: 4, kind: input, shape index: {}]
  %s5 = inlined_call_operand.hbm [shape: f32[2,16,64], index: 5, kind: output, shape index: {}]
  %s6 = sld [smem:[#allocation0]]
  $region77: #{tpu_custom_call.1} parent=0
    _
  %s8 = ssub.s32 1, %s6
  %s9 = scalar_select 0, %s8, %s6
  $region1: #{tpu_custom_call.1} parent=0
    #allocation5 [shape = 'u8[32768]{0}', space=vmem, size = 0x8000, scoped, tag = 'input window, operand 1']
    #allocation6 [shape = 's32[2]{0}', space=sflag, size = 0x8, scoped, tag = 'scoped memory for tpu_custom_call.1']
    #allocation7 [shape = 's32[2]{0}', space=sflag, size = 0x8, scoped, tag = 'scoped memory for tpu_custom_call.1']
    #allocation8 [shape = 'u8[32768]{0}', space=vmem, size = 0x8000, scoped, tag = 'input window, operand 2']
    #allocation9 [shape = 's32[2]{0}', space=sflag, size = 0x8, scoped, tag = 'scoped memory for tpu_custom_call.1']
    #allocation10 [shape = 'u8[16384]{0}', space=vmem, size = 0x4000, scoped, tag = 'output window, operand 0']
    %10 = vsyncpa [#allocation6], 0
    %s11 = scalar_lea.sflag [#allocation6], 1
    %12 = vsyncpa %s11, 0
    %13 = vsyncpa [#allocation9], 0
    %s14 = scalar_lea.sflag [#allocation9], 1
    %15 = vsyncpa %s14, 0
    %16 = vsyncpa [#allocation7], 0
    %s17 = scalar_lea.sflag [#allocation7], 1
    %18 = vsyncpa %s17, 0
    loop: start=0, step=1, limit=4
    $region2: #{tpu_custom_call.1} parent=1 // loop_pre_header
      _
    $region3: #{tpu_custom_call.1} parent=1 // loop_header
      %s20 = sphi 0, %s24
      %p21 = scmp.ge.s32.totalorder %s20, 4
      %s27 = sphi 0, %s46
      %s28 = sphi 0, %s42
      %s29 = sphi 0, %s38
      %s30 = sphi 0, %s27
      %s31 = sphi 0, %s28
      %s32 = sphi 0, %s29
      %s33 = sphi 0, %s30
      %s34 = sphi 0, %s31
      %s35 = sphi 0, %s32
      %s51 = sphi 0, %s53
      %s54 = sphi 0, %s51
      %s55 = sphi 0, %s54
      %s71 = sphi 0, %s55
      %s83 = sphi 0, %s85
      %s86 = sphi 0, %s83
      %s87 = sphi 0, %s86
      %s103 = sphi 0, %s87
      %s115 = sphi 0, %s117
      %s118 = sphi 0, %s115
      %s119 = sphi 0, %s118
      %s135 = sphi 0, %s119
      %s143 = sphi 0, %s145
      %s146 = sphi 0, %s143
      %s147 = sphi 0, %s146
      %s163 = sphi 0, %s147
      %s175 = sphi 0, %s177
      %s178 = sphi 0, %s175
      %s179 = sphi 0, %s178
      %s195 = sphi 0, %s179
      %s203 = sphi 0, %s205
      %s206 = sphi 0, %s203
      %s207 = sphi 0, %s206
      %s223 = sphi 0, %s207
    $region4: #{tpu_custom_call.1} parent=1 // loop_header_branch
      %23 = sbr.rel (%p21) target = $region8
    $region5: #{tpu_custom_call.1} parent=1 // loop_body
      %s25 = ssub.s32 %s20, 1
      %s26 = ssub.s32 %s20, 2
      %s36 = sadd.s32 1, %s29
      %p37 = scmp.ge.s32.totalorder %s36, 1
      %s38 = scalar_select %p37, 0, %s36
      %s39 = sadd.s32 1, %s28
      %s40 = scalar_select %p37, %s39, %s28
      %p41 = scmp.ge.s32.totalorder %s40, 1
      %s42 = scalar_select %p41, 0, %s40
      %s43 = sadd.s32 1, %s27
      %s44 = scalar_select %p41, %s43, %s27
      %p45 = scmp.ge.s32.totalorder %s44, 2
      %s46 = scalar_select %p45, 0, %s44
      %s47 = ssub.s32 %s27, %s46
      %s48 = ssub.s32 %s28, %s42
      %s49 = sor.u32 %s47, %s48
      %p50 = scmp.eq.s32.totalorder %s49, 0
      %s52 = sadd.s32 %s51, 1
      %s53 = scalar_select %p50, %s51, %s52
      %p56 = pneg %p50
      %p57 = scmp.eq.s32.totalorder %s20, 1
      %p58 = por %p56, %p57
      %p59 = scmp.ne.s32.totalorder %s51, %s54
      %p60 = scmp.eq.s32.totalorder %s20, 0
      %p61 = por %p59, %p60
      %p62 = scmp.ne.s32.totalorder %s51, %s54
      %p63 = scmp.eq.s32.totalorder %s25, 1
      %p64 = por %p62, %p63
      %p65 = scmp.ne.s32.totalorder %s54, %s55
      %p66 = scmp.eq.s32.totalorder %s25, 0
      %p67 = por %p65, %p66
      %p68 = scmp.ne.s32.totalorder %s54, %s55
      %p69 = scmp.eq.s32.totalorder %s26, 1
      %p70 = por %p68, %p69
      %p72 = scmp.ne.s32.totalorder %s55, %s71
      %p73 = scmp.eq.s32.totalorder %s26, 0
      %p74 = por %p72, %p73
      %p75 = scmp.lt.s32.totalorder %s28, %s29
      %s76 = scalar_select %p75, %s28, %s29
      %p77 = scmp.lt.s32.totalorder %s42, %s38
      %s78 = scalar_select %p77, %s42, %s38
      %s79 = ssub.s32 %s27, %s46
      %s80 = ssub.s32 %s76, %s78
      %s81 = sor.u32 %s79, %s80
      %p82 = scmp.eq.s32.totalorder %s81, 0
      %s84 = sadd.s32 %s83, 1
      %s85 = scalar_select %p82, %s83, %s84
      %p88 = pneg %p82
      %p89 = scmp.eq.s32.totalorder %s20, 1
      %p90 = por %p88, %p89
      %p91 = scmp.ne.s32.totalorder %s83, %s86
      %p92 = scmp.eq.s32.totalorder %s20, 0
      %p93 = por %p91, %p92
      %p94 = scmp.ne.s32.totalorder %s83, %s86
      %p95 = scmp.eq.s32.totalorder %s25, 1
      %p96 = por %p94, %p95
      %p97 = scmp.ne.s32.totalorder %s86, %s87
      %p98 = scmp.eq.s32.totalorder %s25, 0
      %p99 = por %p97, %p98
      %p100 = scmp.ne.s32.totalorder %s86, %s87
      %p101 = scmp.eq.s32.totalorder %s26, 1
      %p102 = por %p100, %p101
      %p104 = scmp.ne.s32.totalorder %s87, %s103
      %p105 = scmp.eq.s32.totalorder %s26, 0
      %p106 = por %p104, %p105
      %p107 = scmp.lt.s32.totalorder %s28, %s29
      %s108 = scalar_select %p107, %s28, %s29
      %p109 = scmp.lt.s32.totalorder %s42, %s38
      %s110 = scalar_select %p109, %s42, %s38
      %s111 = ssub.s32 %s27, %s46
      %s112 = ssub.s32 %s108, %s110
      %s113 = sor.u32 %s111, %s112
      %p114 = scmp.eq.s32.totalorder %s113, 0
      %s116 = sadd.s32 %s115, 1
      %s117 = scalar_select %p114, %s115, %s116
      %p120 = pneg %p114
      %p121 = scmp.eq.s32.totalorder %s20, 1
      %p122 = por %p120, %p121
      %p123 = scmp.ne.s32.totalorder %s115, %s118
      %p124 = scmp.eq.s32.totalorder %s20, 0
      %p125 = por %p123, %p124
      %p126 = scmp.ne.s32.totalorder %s115, %s118
      %p127 = scmp.eq.s32.totalorder %s25, 1
      %p128 = por %p126, %p127
      %p129 = scmp.ne.s32.totalorder %s118, %s119
      %p130 = scmp.eq.s32.totalorder %s25, 0
      %p131 = por %p129, %p130
      %p132 = scmp.ne.s32.totalorder %s118, %s119
      %p133 = scmp.eq.s32.totalorder %s26, 1
      %p134 = por %p132, %p133
      %p136 = scmp.ne.s32.totalorder %s119, %s135
      %p137 = scmp.eq.s32.totalorder %s26, 0
      %p138 = por %p136, %p137
      %s139 = ssub.s32 %s27, %s46
      %s140 = ssub.s32 %s28, %s42
      %s141 = sor.u32 %s139, %s140
      %p142 = scmp.eq.s32.totalorder %s141, 0
      %s144 = sadd.s32 %s143, 1
      %s145 = scalar_select %p142, %s143, %s144
      %p148 = pneg %p142
      %p149 = scmp.eq.s32.totalorder %s20, 1
      %p150 = por %p148, %p149
      %p151 = scmp.ne.s32.totalorder %s143, %s146
      %p152 = scmp.eq.s32.totalorder %s20, 0
      %p153 = por %p151, %p152
      %p154 = scmp.ne.s32.totalorder %s143, %s146
      %p155 = scmp.eq.s32.totalorder %s25, 1
      %p156 = por %p154, %p155
      %p157 = scmp.ne.s32.totalorder %s146, %s147
      %p158 = scmp.eq.s32.totalorder %s25, 0
      %p159 = por %p157, %p158
      %p160 = scmp.ne.s32.totalorder %s146, %s147
      %p161 = scmp.eq.s32.totalorder %s26, 1
      %p162 = por %p160, %p161
      %p164 = scmp.ne.s32.totalorder %s147, %s163
      %p165 = scmp.eq.s32.totalorder %s26, 0
      %p166 = por %p164, %p165
      %p167 = scmp.lt.s32.totalorder %s28, %s29
      %s168 = scalar_select %p167, %s28, %s29
      %p169 = scmp.lt.s32.totalorder %s42, %s38
      %s170 = scalar_select %p169, %s42, %s38
      %s171 = ssub.s32 %s27, %s46
      %s172 = ssub.s32 %s168, %s170
      %s173 = sor.u32 %s171, %s172
      %p174 = scmp.eq.s32.totalorder %s173, 0
      %s176 = sadd.s32 %s175, 1
      %s177 = scalar_select %p174, %s175, %s176
      %p180 = pneg %p174
      %p181 = scmp.eq.s32.totalorder %s20, 1
      %p182 = por %p180, %p181
      %p183 = scmp.ne.s32.totalorder %s175, %s178
      %p184 = scmp.eq.s32.totalorder %s20, 0
      %p185 = por %p183, %p184
      %p186 = scmp.ne.s32.totalorder %s175, %s178
      %p187 = scmp.eq.s32.totalorder %s25, 1
      %p188 = por %p186, %p187
      %p189 = scmp.ne.s32.totalorder %s178, %s179
      %p190 = scmp.eq.s32.totalorder %s25, 0
      %p191 = por %p189, %p190
      %p192 = scmp.ne.s32.totalorder %s178, %s179
      %p193 = scmp.eq.s32.totalorder %s26, 1
      %p194 = por %p192, %p193
      %p196 = scmp.ne.s32.totalorder %s179, %s195
      %p197 = scmp.eq.s32.totalorder %s26, 0
      %p198 = por %p196, %p197
      %s199 = ssub.s32 %s27, %s46
      %s200 = ssub.s32 %s28, %s42
      %s201 = sor.u32 %s199, %s200
      %p202 = scmp.eq.s32.totalorder %s201, 0
      %s204 = sadd.s32 %s203, 1
      %s205 = scalar_select %p202, %s203, %s204
      %p208 = pneg %p202
      %p209 = scmp.eq.s32.totalorder %s20, 1
      %p210 = por %p208, %p209
      %p211 = scmp.ne.s32.totalorder %s203, %s206
      %p212 = scmp.eq.s32.totalorder %s20, 0
      %p213 = por %p211, %p212
      %p214 = scmp.ne.s32.totalorder %s203, %s206
      %p215 = scmp.eq.s32.totalorder %s25, 1
      %p216 = por %p214, %p215
      %p217 = scmp.ne.s32.totalorder %s206, %s207
      %p218 = scmp.eq.s32.totalorder %s25, 0
      %p219 = por %p217, %p218
      %p220 = scmp.ne.s32.totalorder %s206, %s207
      %p221 = scmp.eq.s32.totalorder %s26, 1
      %p222 = por %p220, %p221
      %p224 = scmp.ne.s32.totalorder %s207, %s223
      %p225 = scmp.eq.s32.totalorder %s26, 0
      %p226 = por %p224, %p225
      %p227 = scmp.le.s32.totalorder 1, %s20
      %p228 = scmp.lt.s32.totalorder %s20, 3
      %p229 = pnand %p227, %p228
      %p230 = pneg %p229
      // Predicated region
      $region9: #{tpu_custom_call.1} parent=5 // pred_check
        _
      $region10: #{tpu_custom_call.1} parent=5 // pred_check_branch
        %232 = sbr.rel (%p229) target = $region12
      $region11: #{tpu_custom_call.1} parent=5 // pred_region
        %s233 = ssub.s32 %s20, 1
      $region12: #{tpu_custom_call.1} parent=5 // pred_fallthru
        _
      %p234 = scmp.lt.s32.totalorder %s20, 2
      // Predicated region
      $region13: #{tpu_custom_call.1} parent=5 // pred_check
        %p235 = pneg %p234
      $region14: #{tpu_custom_call.1} parent=5 // pred_check_branch
        %237 = sbr.rel (%p235) target = $region16
      $region15: #{tpu_custom_call.1} parent=5 // pred_region
        // Predicated region
        $region17: #{tpu_custom_call.1} parent=15 // pred_check
          %p238 = pneg %p61
        $region18: #{tpu_custom_call.1} parent=15 // pred_check_branch
          %240 = sbr.rel (%p238) target = $region20
        $region19: #{tpu_custom_call.1} parent=15 // pred_region
          %s241 = smul.u32 2, %s28
          %p242 = scmp.lt.s32.totalorder %s27, 1
          %s243 = scalar_select %p242, %s27, 1
          %p244 = scmp.lt.s32.totalorder %s241, 1
          %s245 = scalar_select %p244, %s241, 1
          %s246 = smul.addr %s243, 4
          %s247 = sadd.s32 %s245, %s246
          %s248 = smul.addr %s247, 8
          %s249 = scalar_lea.vmem %s0, %s248
          %s250 = smul.u32 2, %s28
        $region20: #{tpu_custom_call.1} parent=15 // pred_fallthru
          _
        // Predicated region
        $region21: #{tpu_custom_call.1} parent=15 // pred_check
          %p251 = pneg %p93
        $region22: #{tpu_custom_call.1} parent=15 // pred_check_branch
          %253 = sbr.rel (%p251) target = $region24
        $region23: #{tpu_custom_call.1} parent=15 // pred_region
          %s254 = sand.u32 %s83, 1
          %s255 = scalar_lea.sflag [#allocation6], %s254
          %s256 = sand.u32 %s83, 1
          %s257 = smul.addr %s256, 32
          %s258 = scalar_lea.vmem [#allocation5], %s257
          %p259 = scmp.lt.s32.totalorder %s28, %s29
          %s260 = scalar_select %p259, %s28, %s29
          %s261 = smul.u32 2, %s260
          %s263 = ssub.s32 512, 512
          %264 = vsyncadd %s255, %s263
          %s265 = smul.addr %s27, 4
          %s266 = sadd.s32 %s261, %s265
          %s267 = smul.addr %s266, 128
          %s268 = scalar_lea.hbm %s1, %s267
          %s269 = sshll.u32 %s258, 4
          %s270 = int_to_ptr.vmem [resolvable:$true] %s269
          %275 = dma.hbm_to_vmem [thread:$0]  %s268, 512, %s270, %s255, 128, 128, 8
        $region24: #{tpu_custom_call.1} parent=15 // pred_fallthru
          _
        // Predicated region
        $region25: #{tpu_custom_call.1} parent=15 // pred_check
          %p276 = pneg %p125
        $region26: #{tpu_custom_call.1} parent=15 // pred_check_branch
          %278 = sbr.rel (%p276) target = $region28
        $region27: #{tpu_custom_call.1} parent=15 // pred_region
          %s279 = sand.u32 %s115, 1
          %s280 = scalar_lea.sflag [#allocation9], %s279
          %s281 = sand.u32 %s115, 1
          %s282 = smul.addr %s281, 32
          %s283 = scalar_lea.vmem [#allocation8], %s282
          %p284 = scmp.lt.s32.totalorder %s28, %s29
          %s285 = scalar_select %p284, %s28, %s29
          %s286 = smul.u32 2, %s285
          %s288 = ssub.s32 512, 512
          %289 = vsyncadd %s280, %s288
          %s290 = smul.addr %s27, 4
          %s291 = sadd.s32 %s286, %s290
          %s292 = smul.addr %s291, 128
          %s293 = scalar_lea.hbm %s2, %s292
          %s294 = sshll.u32 %s283, 4
          %s295 = int_to_ptr.vmem [resolvable:$true] %s294
          %300 = dma.hbm_to_vmem [thread:$0]  %s293, 512, %s295, %s280, 128, 128, 8
        $region28: #{tpu_custom_call.1} parent=15 // pred_fallthru
          _
        // Predicated region
        $region29: #{tpu_custom_call.1} parent=15 // pred_check
          %p301 = pneg %p153
        $region30: #{tpu_custom_call.1} parent=15 // pred_check_branch
          %303 = sbr.rel (%p301) target = $region32
        $region31: #{tpu_custom_call.1} parent=15 // pred_region
          %s304 = smul.u32 2, %s28
          %p305 = scmp.lt.s32.totalorder %s27, 1
          %s306 = scalar_select %p305, %s27, 1
          %p307 = scmp.lt.s32.totalorder %s304, 1
          %s308 = scalar_select %p307, %s304, 1
          %s309 = smul.addr %s306, 4
          %s310 = sadd.s32 %s308, %s309
          %s311 = smul.addr %s310, 8
          %s312 = scalar_lea.vmem %s3, %s311
          %s313 = smul.u32 2, %s28
        $region32: #{tpu_custom_call.1} parent=15 // pred_fallthru
          _
        // Predicated region
        $region33: #{tpu_custom_call.1} parent=15 // pred_check
          %p314 = pneg %p185
        $region34: #{tpu_custom_call.1} parent=15 // pred_check_branch
          %316 = sbr.rel (%p314) target = $region36
        $region35: #{tpu_custom_call.1} parent=15 // pred_region
          %p317 = scmp.lt.s32.totalorder %s28, %s29
          %s318 = scalar_select %p317, %s28, %s29
          %p319 = scmp.lt.s32.totalorder %s27, 1
          %s320 = scalar_select %p319, %s27, 1
          %p321 = scmp.lt.s32.totalorder %s318, 0
          %s322 = scalar_select %p321, %s318, 0
          %s323 = smul.addr %s320, 2
          %s324 = sadd.s32 %s322, %s323
          %s325 = scalar_lea.vmem %s4, %s324
          %p326 = scmp.lt.s32.totalorder %s28, %s29
          %s327 = scalar_select %p326, %s28, %s29
        $region36: #{tpu_custom_call.1} parent=15 // pred_fallthru
          _
      $region16: #{tpu_custom_call.1} parent=5 // pred_fallthru
        _
      %p328 = scmp.le.s32.totalorder 1, %s20
      %p329 = scmp.lt.s32.totalorder %s20, 3
      %p330 = pnand %p328, %p329
      %p331 = pneg %p330
      // Predicated region
      $region37: #{tpu_custom_call.1} parent=5 // pred_check
        _
      $region38: #{tpu_custom_call.1} parent=5 // pred_check_branch
        %333 = sbr.rel (%p330) target = $region40
      $region39: #{tpu_custom_call.1} parent=5 // pred_region
        %s334 = ssub.s32 %s20, 1
        %s335 = sand.u32 %s86, 1
        %s336 = scalar_lea.sflag [#allocation6], %s335
        %s337 = sand.u32 %s86, 1
        %s338 = smul.addr %s337, 32
        %s339 = scalar_lea.vmem [#allocation5], %s338
        // Predicated region
        $region41: #{tpu_custom_call.1} parent=39 // pred_check
          %p340 = pneg %p99
        $region42: #{tpu_custom_call.1} parent=39 // pred_check_branch
          %342 = sbr.rel (%p340) target = $region44
        $region43: #{tpu_custom_call.1} parent=39 // pred_region
          %343 = dma.done %s336, 512
        $region44: #{tpu_custom_call.1} parent=39 // pred_fallthru
          _
        %s344 = sand.u32 %s118, 1
        %s345 = scalar_lea.sflag [#allocation9], %s344
        %s346 = sand.u32 %s118, 1
        %s347 = smul.addr %s346, 32
        %s348 = scalar_lea.vmem [#allocation8], %s347
        // Predicated region
        $region45: #{tpu_custom_call.1} parent=39 // pred_check
          %p349 = pneg %p131
        $region46: #{tpu_custom_call.1} parent=39 // pred_check_branch
          %351 = sbr.rel (%p349) target = $region48
        $region47: #{tpu_custom_call.1} parent=39 // pred_region
          %352 = dma.done %s345, 512
        $region48: #{tpu_custom_call.1} parent=39 // pred_fallthru
          _
        %s353 = smul.u32 2, %s31
        %p354 = scmp.lt.s32.totalorder %s30, 1
        %s355 = scalar_select %p354, %s30, 1
        %p356 = scmp.lt.s32.totalorder %s353, 1
        %s357 = scalar_select %p356, %s353, 1
        %s358 = smul.addr %s355, 4
        %s359 = sadd.s32 %s357, %s358
        %s360 = smul.addr %s359, 8
        %s361 = scalar_lea.vmem %s0, %s360
        %p362 = pneg %p67
        %p363 = pneg %p64
        %s364 = sand.u32 %s86, 1
        %s365 = scalar_lea.sflag [#allocation6], %s364
        %s366 = sand.u32 %s86, 1
        %s367 = smul.addr %s366, 32
        %s368 = scalar_lea.vmem [#allocation5], %s367
        %p369 = pneg %p99
        %p370 = pneg %p96
        %s371 = sand.u32 %s118, 1
        %s372 = scalar_lea.sflag [#allocation9], %s371
        %s373 = sand.u32 %s118, 1
        %s374 = smul.addr %s373, 32
        %s375 = scalar_lea.vmem [#allocation8], %s374
        %p376 = pneg %p131
        %p377 = pneg %p128
        %s378 = smul.u32 2, %s31
        %p379 = scmp.lt.s32.totalorder %s30, 1
        %s380 = scalar_select %p379, %s30, 1
        %p381 = scmp.lt.s32.totalorder %s378, 1
        %s382 = scalar_select %p381, %s378, 1
        %s383 = smul.addr %s380, 4
        %s384 = sadd.s32 %s382, %s383
        %s385 = smul.addr %s384, 8
        %s386 = scalar_lea.vmem %s3, %s385
        %p387 = pneg %p159
        %p388 = pneg %p156
        %p389 = scmp.lt.s32.totalorder %s31, %s32
        %s390 = scalar_select %p389, %s31, %s32
        %p391 = scmp.lt.s32.totalorder %s30, 1
        %s392 = scalar_select %p391, %s30, 1
        %p393 = scmp.lt.s32.totalorder %s390, 0
        %s394 = scalar_select %p393, %s390, 0
        %s395 = smul.addr %s392, 2
        %s396 = sadd.s32 %s394, %s395
        %s397 = scalar_lea.vmem %s4, %s396
        %p398 = pneg %p191
        %p399 = pneg %p188
        %p400 = pneg %p219
        %p401 = pneg %p216
        %s402 = sand.u32 %s206, 1
        %s403 = scalar_lea.sflag [#allocation7], %s402
        %s404 = sand.u32 %s206, 1
        %s405 = smul.addr %s404, 16
        %s406 = scalar_lea.vmem [#allocation10], %s405
        %s407 = smul.u32 2, %s31
        %p408 = scmp.lt.s32.totalorder %s30, 1
        %s409 = scalar_select %p408, %s30, 1
        %p410 = scmp.lt.s32.totalorder %s407, 1
        %s411 = scalar_select %p410, %s407, 1
        %s412 = smul.addr %s409, 4
        %s413 = sadd.s32 %s411, %s412
        %s414 = smul.addr %s413, 8
        %s415 = scalar_lea.vmem %s0, %s414
        %s416 = smul.u32 2, %s31
        %p417 = scmp.lt.s32.totalorder %s31, %s32
        %s418 = scalar_select %p417, %s31, %s32
        %s419 = smul.u32 2, %s418
        %p420 = scmp.lt.s32.totalorder %s31, %s32
        %s421 = scalar_select %p420, %s31, %s32
        %s422 = smul.u32 2, %s421
        %s423 = smul.u32 2, %s31
        %p424 = scmp.lt.s32.totalorder %s30, 1
        %s425 = scalar_select %p424, %s30, 1
        %p426 = scmp.lt.s32.totalorder %s423, 1
        %s427 = scalar_select %p426, %s423, 1
        %s428 = smul.addr %s425, 4
        %s429 = sadd.s32 %s427, %s428
        %s430 = smul.addr %s429, 8
        %s431 = scalar_lea.vmem %s3, %s430
        %s432 = smul.u32 2, %s31
        %p433 = scmp.lt.s32.totalorder %s31, %s32
        %s434 = scalar_select %p433, %s31, %s32
        %p435 = scmp.lt.s32.totalorder %s30, 1
        %s436 = scalar_select %p435, %s30, 1
        %p437 = scmp.lt.s32.totalorder %s434, 0
        %s438 = scalar_select %p437, %s434, 0
        %s439 = smul.addr %s436, 2
        %s440 = sadd.s32 %s438, %s439
        %s441 = scalar_lea.vmem %s4, %s440
        %p442 = scmp.lt.s32.totalorder %s31, %s32
        %s443 = scalar_select %p442, %s31, %s32
        %s444 = smul.u32 2, %s31
        %p445 = scmp.eq.s32.totalorder %s32, 0
        // Predicated region
        $region49: #{tpu_custom_call.1} parent=39 // pred_check
          %p446 = pneg %p445
        $region50: #{tpu_custom_call.1} parent=39 // pred_check_branch
          %448 = sbr.rel (%p446) target = $region52
        $region51: #{tpu_custom_call.1} parent=39 // pred_region
          %vm449 = vcmask 7168
          %450 = vst.msk [vmem:[#allocation2] sm:$0xff] %vm449, -1e+30
          %451 = vst.msk [vmem:[#allocation2 + $0x8] sm:$0xff] %vm449, -1e+30
          %452 = vst.msk [vmem:[#allocation2 + $0x10] sm:$0xff] %vm449, -1e+30
          %453 = vst.msk [vmem:[#allocation2 + $0x18] sm:$0xff] %vm449, -1e+30
          %454 = vst.msk [vmem:[#allocation3] sm:$0xff] %vm449, 0.0
          %455 = vst.msk [vmem:[#allocation3 + $0x8] sm:$0xff] %vm449, 0.0
          %456 = vst.msk [vmem:[#allocation3 + $0x10] sm:$0xff] %vm449, 0.0
          %457 = vst.msk [vmem:[#allocation3 + $0x18] sm:$0xff] %vm449, 0.0
          %vm458 = vcmask 261120
          %459 = vst.msk [vmem:[#allocation4] sm:$0xff] %vm458, 0.0
          %460 = vst.msk [vmem:[#allocation4 + $0x8] sm:$0xff] %vm458, 0.0
          %461 = vst.msk [vmem:[#allocation4 + $0x10] sm:$0xff] %vm458, 0.0
          %462 = vst.msk [vmem:[#allocation4 + $0x18] sm:$0xff] %vm458, 0.0
        $region52: #{tpu_custom_call.1} parent=39 // pred_fallthru
          _
        %p463 = scmp.eq.s32.totalorder %s32, %s31
        // Predicated region
        $region53: #{tpu_custom_call.1} parent=39 // pred_check
          %p464 = pneg %p463
        $region54: #{tpu_custom_call.1} parent=39 // pred_check_branch
          %466 = sbr.rel (%p464) target = $region56
        $region55: #{tpu_custom_call.1} parent=39 // pred_region
          %v467 = vlaneseq
          %v468 = vshrl.u32 %v467, 7
          %v469 = vadd.s32 %v468, 8
          %v470 = vlaneseq
          %v471 = vand.u32 %v470, 127
          %vm472 = vcmp.le.s32.totalorder %v471, %v468
          %vm473 = vcmp.le.s32.totalorder %v471, %v469
          %v474 = vld [vmem:[%s415] sm:$0xff]
          %v475 = vld [vmem:[%s415 + $0x8] sm:$0xff]
          %v476 = vld [vmem:[%s415 + $0x10] sm:$0xff]
          %v477 = vld [vmem:[%s415 + $0x18] sm:$0xff]
          %v478 = vld [vmem:[%s339] sm:$0xff]
          %v479 = vld [vmem:[%s339 + $0x8] sm:$0xff]
          %v480 = vld [vmem:[%s339 + $0x10] sm:$0xff]
          %v481 = vld [vmem:[%s339 + $0x18] sm:$0xff]
          %v482 = vld [vmem:[%s348] sm:$0xff]
          %v483 = vld [vmem:[%s348 + $0x8] sm:$0xff]
          %v484 = vld [vmem:[%s348 + $0x10] sm:$0xff]
          %v485 = vld [vmem:[%s348 + $0x18] sm:$0xff]
          %v486 = vld [vmem:[%s431] sm:$0xff]
          %v487 = vld [vmem:[%s431 + $0x8] sm:$0xff]
          %v488 = vld [vmem:[%s431 + $0x10] sm:$0xff]
          %v489 = vld [vmem:[%s431 + $0x18] sm:$0xff]
          %v490 = vld [vmem:[%s441] sm:$0x1]
          %v491 = vld [vmem:[%s441 + $0x1] sm:$0x1]
          %493 = vset.pattern.permute.xlu0 0
          %494 = vperm.xlu0 %493, %v486
          %v495 = vpop.permute.xlu0 %494
          %498 = vset.pattern.permute.xlu0 0
          %499 = vperm.xlu0 %498, %v487
          %v500 = vpop.permute.xlu0 %499
          %503 = vset.pattern.permute.xlu0 0
          %504 = vperm.xlu0 %503, %v488
          %v505 = vpop.permute.xlu0 %504
          %508 = vset.pattern.permute.xlu0 0
          %509 = vperm.xlu0 %508, %v489
          %v510 = vpop.permute.xlu0 %509
          %v514 = vlaneseq
          %v515 = vshrl.u32 %v514, 7
          %v516 = vsub.s32 0, %v515
          %v517 = vrot.slane %v490, %v516
          %v518 = vlaneseq
          %v519 = vshrl.u32 %v518, 7
          %v520 = vsub.s32 0, %v519
          %v521 = vrot.slane %v491, %v520
          %v524 = vadd.f32 %v495, %v517
          %v525 = vadd.f32 %v500, %v517
          %v526 = vadd.f32 %v505, %v521
          %v527 = vadd.f32 %v510, %v521
          %v528 = vsel %vm472, 1, 0
          %v529 = vsel %vm473, 1, 0
          %vm530 = vcmp.eq.s32.totalorder %v528, 1
          %vm531 = vcmp.eq.s32.totalorder %v529, 1
          %v532 = vsel %vm530, %v524, -inf
          %v533 = vsel %vm531, %v525, -inf
          %v534 = vsel %vm530, %v526, -inf
          %v535 = vsel %vm531, %v527, -inf
          %v536 = vld [vmem:[#allocation2] sm:$0xff]
          %v537 = vld [vmem:[#allocation2 + $0x8] sm:$0xff]
          %v538 = vld [vmem:[#allocation2 + $0x10] sm:$0xff]
          %v539 = vld [vmem:[#allocation2 + $0x18] sm:$0xff]
          %vm540 = vcmask 130048
          %v541 = vsel %vm540, %v532, -inf
          %542 = vmax.xlane.f32.xlu0 %v541
          %v543 = vpop.xlane.xlu0 %542
          %v544 = vsel %vm540, %v533, -inf
          %545 = vmax.xlane.f32.xlu0 %v544
          %v546 = vpop.xlane.xlu0 %545
          %v547 = vsel %vm540, %v534, -inf
          %548 = vmax.xlane.f32.xlu0 %v547
          %v549 = vpop.xlane.xlu0 %548
          %v550 = vsel %vm540, %v535, -inf
          %551 = vmax.xlane.f32.xlu0 %v550
          %v552 = vpop.xlane.xlu0 %551
          %v553 = vmax.f32 %v536, %v543
          %v554 = vmax.f32 %v537, %v546
          %v555 = vmax.f32 %v538, %v549
          %v556 = vmax.f32 %v539, %v552
          %558 = vset.pattern.permute.xlu0 0
          %559 = vperm.xlu0 %558, %v553
          %v560 = vpop.permute.xlu0 %559
          %563 = vset.pattern.permute.xlu0 0
          %564 = vperm.xlu0 %563, %v554
          %v565 = vpop.permute.xlu0 %564
          %568 = vset.pattern.permute.xlu0 0
          %569 = vperm.xlu0 %568, %v555
          %v570 = vpop.permute.xlu0 %569
          %573 = vset.pattern.permute.xlu0 0
          %574 = vperm.xlu0 %573, %v556
          %v575 = vpop.permute.xlu0 %574
          %v577 = vsub.f32 %v532, %v560
          %v578 = vsub.f32 %v533, %v565
          %v579 = vsub.f32 %v534, %v570
          %v580 = vsub.f32 %v535, %v575
          %v581 = vmul.f32 %v577, 1.442695
          %v582 = vpow.pop %v581
          %v583 = vmul.f32 %v578, 1.442695
          %v584 = vpow.pop %v583
          %v585 = vmul.f32 %v579, 1.442695
          %v586 = vpow.pop %v585
          %v587 = vmul.f32 %v580, 1.442695
          %v588 = vpow.pop %v587
          %vm589 = vcmask 261120
          %v591 = vsel %vm589, %v474, 0
          %v594 = vsel %vm589, %v475, 0
          %v597 = vsel %vm589, %v478, 0
          %v600 = vsel %vm589, %v479, 0
          %602 = vmatprep.subr.mxu0 0.0
          %603 = vmatpush1.xpose.msra.mxu0 %v597
          %604 = vmatprep.subr.mxu0 0.0
          %605 = vmatpush1.xpose.msra.mxu0 %v600
          %606 = vmatprep.subr.mxu0 0.0
          %607 = vmatpush1.xpose.msra.mxu0 0.0
          %608 = vmatprep.subr.mxu0 0.0
          %609 = vmatpush1.xpose.msra.mxu0 0.0
          %610 = vmatprep.subr.mxu0 0.0
          %611 = vmatpush1.xpose.msra.mxu0 0.0
          %612 = vmatprep.subr.mxu0 0.0
          %613 = vmatpush1.xpose.msra.mxu0 0.0
          %614 = vmatprep.subr.mxu0 0.0
          %615 = vmatpush1.xpose.msra.mxu0 0.0
          %616 = vmatprep.subr.mxu0 0.0
          %617 = vmatpush1.xpose.msra.mxu0 0.0
          %618 = vmatprep.subr.mxu0 0.0
          %619 = vmatpush1.xpose.msra.mxu0 0.0
          %620 = vmatprep.subr.mxu0 0.0
          %621 = vmatpush1.xpose.msra.mxu0 0.0
          %622 = vmatprep.subr.mxu0 0.0
          %623 = vmatpush1.xpose.msra.mxu0 0.0
          %624 = vmatprep.subr.mxu0 0.0
          %625 = vmatpush1.xpose.msra.mxu0 0.0
          %626 = vmatprep.subr.mxu0 0.0
          %627 = vmatpush1.xpose.msra.mxu0 0.0
          %628 = vmatprep.subr.mxu0 0.0
          %629 = vmatpush1.xpose.msra.mxu0 0.0
          %630 = vmatprep.subr.mxu0 0.0
          %631 = vmatpush1.xpose.msra.mxu0 0.0
          %632 = vmatprep.subr.mxu0 0.0
          %633 = vmatpush1.xpose.msra.mxu0 0.0
          %634 = vmatprep.subr.mxu0 0.0
          %635 = vmatpush1.xpose.msra.mxu0 0.0
          %636 = vmatprep.subr.mxu0 0.0
          %637 = vmatpush1.xpose.msra.mxu0 0.0
          %638 = vmatprep.subr.mxu0 0.0
          %639 = vmatpush1.xpose.msra.mxu0 0.0
          %640 = vmatprep.subr.mxu0 0.0
          %641 = vmatpush1.xpose.msra.mxu0 0.0
          %642 = vmatprep.subr.mxu0 0.0
          %643 = vmatpush1.xpose.msra.mxu0 0.0
          %644 = vmatprep.subr.mxu0 0.0
          %645 = vmatpush1.xpose.msra.mxu0 0.0
          %646 = vmatprep.subr.mxu0 0.0
          %647 = vmatpush1.xpose.msra.mxu0 0.0
          %648 = vmatprep.subr.mxu0 0.0
          %649 = vmatpush1.xpose.msra.mxu0 0.0
          %650 = vmatprep.subr.mxu0 0.0
          %651 = vmatpush1.xpose.msra.mxu0 0.0
          %652 = vmatprep.subr.mxu0 0.0
          %653 = vmatpush1.xpose.msra.mxu0 0.0
          %654 = vmatprep.subr.mxu0 0.0
          %655 = vmatpush1.xpose.msra.mxu0 0.0
          %656 = vmatprep.subr.mxu0 0.0
          %657 = vmatpush1.xpose.msra.mxu0 0.0
          %658 = vmatprep.subr.mxu0 0.0
          %659 = vmatpush1.xpose.msra.mxu0 0.0
          %660 = vmatprep.subr.mxu0 0.0
          %661 = vmatpush1.xpose.msra.mxu0 0.0
          %662 = vmatprep.subr.mxu0 0.0
          %663 = vmatpush1.xpose.msra.mxu0 0.0
          %664 = vmatprep.subr.mxu0 0.0
          %665 = vmatpush1.xpose.msra.mxu0 0.0
          %666 = vmatprep.mubr.f32.mxu0 0.0
          %667 = vmatmul.mubr.f32.gmra.mrb[0].mxu0 %v591
          %v668 = vpop.f32.mrb[0].mxu0
          %v669 = vadd.f32 0.0, %v668
          %v670 = vpop.f32.mrb[0].mxu0
          %671 = vmatprep.mubr.f32.mxu0 0.0
          %672 = vmatmul.mubr.f32.gmra.mrb[0].mxu0 %v594
          %v673 = vpop.f32.mrb[0].mxu0
          %v674 = vadd.f32 0.0, %v673
          %v675 = vpop.f32.mrb[0].mxu0
          %676 = vdwg.mxu0
          %v678 = vsel %vm589, %v476, 0
          %v681 = vsel %vm589, %v477, 0
          %v684 = vsel %vm589, %v480, 0
          %v687 = vsel %vm589, %v481, 0
          %689 = vmatprep.subr.mxu0 0.0
          %690 = vmatpush1.xpose.msra.mxu0 %v684
          %691 = vmatprep.subr.mxu0 0.0
          %692 = vmatpush1.xpose.msra.mxu0 %v687
          %693 = vmatprep.subr.mxu0 0.0
          %694 = vmatpush1.xpose.msra.mxu0 0.0
          %695 = vmatprep.subr.mxu0 0.0
          %696 = vmatpush1.xpose.msra.mxu0 0.0
          %697 = vmatprep.subr.mxu0 0.0
          %698 = vmatpush1.xpose.msra.mxu0 0.0
          %699 = vmatprep.subr.mxu0 0.0
          %700 = vmatpush1.xpose.msra.mxu0 0.0
          %701 = vmatprep.subr.mxu0 0.0
          %702 = vmatpush1.xpose.msra.mxu0 0.0
          %703 = vmatprep.subr.mxu0 0.0
          %704 = vmatpush1.xpose.msra.mxu0 0.0
          %705 = vmatprep.subr.mxu0 0.0
          %706 = vmatpush1.xpose.msra.mxu0 0.0
          %707 = vmatprep.subr.mxu0 0.0
          %708 = vmatpush1.xpose.msra.mxu0 0.0
          %709 = vmatprep.subr.mxu0 0.0
          %710 = vmatpush1.xpose.msra.mxu0 0.0
          %711 = vmatprep.subr.mxu0 0.0
          %712 = vmatpush1.xpose.msra.mxu0 0.0
          %713 = vmatprep.subr.mxu0 0.0
          %714 = vmatpush1.xpose.msra.mxu0 0.0
          %715 = vmatprep.subr.mxu0 0.0
          %716 = vmatpush1.xpose.msra.mxu0 0.0
          %717 = vmatprep.subr.mxu0 0.0
          %718 = vmatpush1.xpose.msra.mxu0 0.0
          %719 = vmatprep.subr.mxu0 0.0
          %720 = vmatpush1.xpose.msra.mxu0 0.0
          %721 = vmatprep.subr.mxu0 0.0
          %722 = vmatpush1.xpose.msra.mxu0 0.0
          %723 = vmatprep.subr.mxu0 0.0
          %724 = vmatpush1.xpose.msra.mxu0 0.0
          %725 = vmatprep.subr.mxu0 0.0
          %726 = vmatpush1.xpose.msra.mxu0 0.0
          %727 = vmatprep.subr.mxu0 0.0
          %728 = vmatpush1.xpose.msra.mxu0 0.0
          %729 = vmatprep.subr.mxu0 0.0
          %730 = vmatpush1.xpose.msra.mxu0 0.0
          %731 = vmatprep.subr.mxu0 0.0
          %732 = vmatpush1.xpose.msra.mxu0 0.0
          %733 = vmatprep.subr.mxu0 0.0
          %734 = vmatpush1.xpose.msra.mxu0 0.0
          %735 = vmatprep.subr.mxu0 0.0
          %736 = vmatpush1.xpose.msra.mxu0 0.0
          %737 = vmatprep.subr.mxu0 0.0
          %738 = vmatpush1.xpose.msra.mxu0 0.0
          %739 = vmatprep.subr.mxu0 0.0
          %740 = vmatpush1.xpose.msra.mxu0 0.0
          %741 = vmatprep.subr.mxu0 0.0
          %742 = vmatpush1.xpose.msra.mxu0 0.0
          %743 = vmatprep.subr.mxu0 0.0
          %744 = vmatpush1.xpose.msra.mxu0 0.0
          %745 = vmatprep.subr.mxu0 0.0
          %746 = vmatpush1.xpose.msra.mxu0 0.0
          %747 = vmatprep.subr.mxu0 0.0
          %748 = vmatpush1.xpose.msra.mxu0 0.0
          %749 = vmatprep.subr.mxu0 0.0
          %750 = vmatpush1.xpose.msra.mxu0 0.0
          %751 = vmatprep.subr.mxu0 0.0
          %752 = vmatpush1.xpose.msra.mxu0 0.0
          %753 = vmatprep.mubr.f32.mxu0 0.0
          %754 = vmatmul.mubr.f32.gmra.mrb[0].mxu0 %v678
          %v755 = vpop.f32.mrb[0].mxu0
          %v756 = vadd.f32 0.0, %v755
          %v757 = vpop.f32.mrb[0].mxu0
          %758 = vmatprep.mubr.f32.mxu0 0.0
          %759 = vmatmul.mubr.f32.gmra.mrb[0].mxu0 %v681
          %v760 = vpop.f32.mrb[0].mxu0
          %v761 = vadd.f32 0.0, %v760
          %v762 = vpop.f32.mrb[0].mxu0
          %763 = vdwg.mxu0
          %v764 = vmul.f32 %v669, %v582
          %v765 = vmul.f32 %v674, %v584
          %v766 = vmul.f32 %v756, %v586
          %v767 = vmul.f32 %v761, %v588
          %v768 = vsub.f32 %v536, %v553
          %v769 = vsub.f32 %v537, %v554
          %v770 = vsub.f32 %v538, %v555
          %v771 = vsub.f32 %v539, %v556
          %v772 = vmul.f32 %v768, 1.442695
          %v773 = vpow.pop %v772
          %v774 = vmul.f32 %v769, 1.442695
          %v775 = vpow.pop %v774
          %v776 = vmul.f32 %v770, 1.442695
          %v777 = vpow.pop %v776
          %v778 = vmul.f32 %v771, 1.442695
          %v779 = vpow.pop %v778
          %v780 = vld [vmem:[#allocation3] sm:$0xff]
          %v781 = vld [vmem:[#allocation3 + $0x8] sm:$0xff]
          %v782 = vld [vmem:[#allocation3 + $0x10] sm:$0xff]
          %v783 = vld [vmem:[#allocation3 + $0x18] sm:$0xff]
          %v784 = vmul.f32 %v773, %v780
          %v785 = vmul.f32 %v775, %v781
          %v786 = vmul.f32 %v777, %v782
          %v787 = vmul.f32 %v779, %v783
          %v788 = vsel %vm540, %v764, 0.0
          %789 = vadd.xlane.f32.xlu0 %v788
          %v790 = vpop.xlane.xlu0 %789
          %v791 = vsel %vm540, %v765, 0.0
          %792 = vadd.xlane.f32.xlu0 %v791
          %v793 = vpop.xlane.xlu0 %792
          %v794 = vsel %vm540, %v766, 0.0
          %795 = vadd.xlane.f32.xlu0 %v794
          %v796 = vpop.xlane.xlu0 %795
          %v797 = vsel %vm540, %v767, 0.0
          %798 = vadd.xlane.f32.xlu0 %v797
          %v799 = vpop.xlane.xlu0 %798
          %v800 = vadd.f32 %v784, %v790
          %v801 = vadd.f32 %v785, %v793
          %v802 = vadd.f32 %v786, %v796
          %v803 = vadd.f32 %v787, %v799
          %vm804 = vcmask 7168
          %805 = vst.msk [vmem:[#allocation3] sm:$0xff] %vm804, %v800
          %806 = vst.msk [vmem:[#allocation3 + $0x8] sm:$0xff] %vm804, %v801
          %807 = vst.msk [vmem:[#allocation3 + $0x10] sm:$0xff] %vm804, %v802
          %808 = vst.msk [vmem:[#allocation3 + $0x18] sm:$0xff] %vm804, %v803
          %v809 = vld [vmem:[#allocation4] sm:$0xff]
          %v810 = vld [vmem:[#allocation4 + $0x8] sm:$0xff]
          %v811 = vld [vmem:[#allocation4 + $0x10] sm:$0xff]
          %v812 = vld [vmem:[#allocation4 + $0x18] sm:$0xff]
          %814 = vset.pattern.permute.xlu0 0
          %815 = vperm.xlu0 %814, %v773
          %v816 = vpop.permute.xlu0 %815
          %819 = vset.pattern.permute.xlu0 0
          %820 = vperm.xlu0 %819, %v775
          %v821 = vpop.permute.xlu0 %820
          %824 = vset.pattern.permute.xlu0 0
          %825 = vperm.xlu0 %824, %v777
          %v826 = vpop.permute.xlu0 %825
          %829 = vset.pattern.permute.xlu0 0
          %830 = vperm.xlu0 %829, %v779
          %v831 = vpop.permute.xlu0 %830
          %v833 = vmul.f32 %v816, %v809
          %v834 = vmul.f32 %v821, %v810
          %v835 = vmul.f32 %v826, %v811
          %v836 = vmul.f32 %v831, %v812
          %v838 = vsel %vm540, %v764, 0
          %v841 = vsel %vm540, %v765, 0
          %843 = vmatprep.subr.mxu0 0.0
          %844 = vmatpush1.msra.mxu0 %v482
          %845 = vmatprep.subr.mxu0 0.0
          %846 = vmatpush1.msra.mxu0 %v483
          %847 = vmatprep.subr.mxu0 0.0
          %848 = vmatpush1.msra.mxu0 0.0
          %849 = vmatprep.subr.mxu0 0.0
          %850 = vmatpush1.msra.mxu0 0.0
          %851 = vmatprep.subr.mxu0 0.0
          %852 = vmatpush1.msra.mxu0 0.0
          %853 = vmatprep.subr.mxu0 0.0
          %854 = vmatpush1.msra.mxu0 0.0
          %855 = vmatprep.subr.mxu0 0.0
          %856 = vmatpush1.msra.mxu0 0.0
          %857 = vmatprep.subr.mxu0 0.0
          %858 = vmatpush1.msra.mxu0 0.0
          %859 = vmatprep.subr.mxu0 0.0
          %860 = vmatpush1.msra.mxu0 0.0
          %861 = vmatprep.subr.mxu0 0.0
          %862 = vmatpush1.msra.mxu0 0.0
          %863 = vmatprep.subr.mxu0 0.0
          %864 = vmatpush1.msra.mxu0 0.0
          %865 = vmatprep.subr.mxu0 0.0
          %866 = vmatpush1.msra.mxu0 0.0
          %867 = vmatprep.subr.mxu0 0.0
          %868 = vmatpush1.msra.mxu0 0.0
          %869 = vmatprep.subr.mxu0 0.0
          %870 = vmatpush1.msra.mxu0 0.0
          %871 = vmatprep.subr.mxu0 0.0
          %872 = vmatpush1.msra.mxu0 0.0
          %873 = vmatprep.subr.mxu0 0.0
          %874 = vmatpush1.msra.mxu0 0.0
          %875 = vmatprep.subr.mxu0 0.0
          %876 = vmatpush1.msra.mxu0 0.0
          %877 = vmatprep.subr.mxu0 0.0
          %878 = vmatpush1.msra.mxu0 0.0
          %879 = vmatprep.subr.mxu0 0.0
          %880 = vmatpush1.msra.mxu0 0.0
          %881 = vmatprep.subr.mxu0 0.0
          %882 = vmatpush1.msra.mxu0 0.0
          %883 = vmatprep.subr.mxu0 0.0
          %884 = vmatpush1.msra.mxu0 0.0
          %885 = vmatprep.subr.mxu0 0.0
          %886 = vmatpush1.msra.mxu0 0.0
          %887 = vmatprep.subr.mxu0 0.0
          %888 = vmatpush1.msra.mxu0 0.0
          %889 = vmatprep.subr.mxu0 0.0
          %890 = vmatpush1.msra.mxu0 0.0
          %891 = vmatprep.subr.mxu0 0.0
          %892 = vmatpush1.msra.mxu0 0.0
          %893 = vmatprep.subr.mxu0 0.0
          %894 = vmatpush1.msra.mxu0 0.0
          %895 = vmatprep.subr.mxu0 0.0
          %896 = vmatpush1.msra.mxu0 0.0
          %897 = vmatprep.subr.mxu0 0.0
          %898 = vmatpush1.msra.mxu0 0.0
          %899 = vmatprep.subr.mxu0 0.0
          %900 = vmatpush1.msra.mxu0 0.0
          %901 = vmatprep.subr.mxu0 0.0
          %902 = vmatpush1.msra.mxu0 0.0
          %903 = vmatprep.subr.mxu0 0.0
          %904 = vmatpush1.msra.mxu0 0.0
          %905 = vmatprep.subr.mxu0 0.0
          %906 = vmatpush1.msra.mxu0 0.0
          %907 = vmatprep.mubr.f32.mxu0 0.0
          %908 = vmatmul.mubr.f32.gmra.mrb[0].mxu0 %v838
          %v909 = vpop.f32.mrb[0].mxu0
          %v910 = vadd.f32 0.0, %v909
          %v911 = vpop.f32.mrb[0].mxu0
          %912 = vmatprep.mubr.f32.mxu0 0.0
          %913 = vmatmul.mubr.f32.gmra.mrb[0].mxu0 %v841
          %v914 = vpop.f32.mrb[0].mxu0
          %v915 = vadd.f32 0.0, %v914
          %v916 = vpop.f32.mrb[0].mxu0
          %917 = vdwg.mxu0
          %v919 = vsel %vm540, %v766, 0
          %v922 = vsel %vm540, %v767, 0
          %924 = vmatprep.subr.mxu0 0.0
          %925 = vmatpush1.msra.mxu0 %v484
          %926 = vmatprep.subr.mxu0 0.0
          %927 = vmatpush1.msra.mxu0 %v485
          %928 = vmatprep.subr.mxu0 0.0
          %929 = vmatpush1.msra.mxu0 0.0
          %930 = vmatprep.subr.mxu0 0.0
          %931 = vmatpush1.msra.mxu0 0.0
          %932 = vmatprep.subr.mxu0 0.0
          %933 = vmatpush1.msra.mxu0 0.0
          %934 = vmatprep.subr.mxu0 0.0
          %935 = vmatpush1.msra.mxu0 0.0
          %936 = vmatprep.subr.mxu0 0.0
          %937 = vmatpush1.msra.mxu0 0.0
          %938 = vmatprep.subr.mxu0 0.0
          %939 = vmatpush1.msra.mxu0 0.0
          %940 = vmatprep.subr.mxu0 0.0
          %941 = vmatpush1.msra.mxu0 0.0
          %942 = vmatprep.subr.mxu0 0.0
          %943 = vmatpush1.msra.mxu0 0.0
          %944 = vmatprep.subr.mxu0 0.0
          %945 = vmatpush1.msra.mxu0 0.0
          %946 = vmatprep.subr.mxu0 0.0
          %947 = vmatpush1.msra.mxu0 0.0
          %948 = vmatprep.subr.mxu0 0.0
          %949 = vmatpush1.msra.mxu0 0.0
          %950 = vmatprep.subr.mxu0 0.0
          %951 = vmatpush1.msra.mxu0 0.0
          %952 = vmatprep.subr.mxu0 0.0
          %953 = vmatpush1.msra.mxu0 0.0
          %954 = vmatprep.subr.mxu0 0.0
          %955 = vmatpush1.msra.mxu0 0.0
          %956 = vmatprep.subr.mxu0 0.0
          %957 = vmatpush1.msra.mxu0 0.0
          %958 = vmatprep.subr.mxu0 0.0
          %959 = vmatpush1.msra.mxu0 0.0
          %960 = vmatprep.subr.mxu0 0.0
          %961 = vmatpush1.msra.mxu0 0.0
          %962 = vmatprep.subr.mxu0 0.0
          %963 = vmatpush1.msra.mxu0 0.0
          %964 = vmatprep.subr.mxu0 0.0
          %965 = vmatpush1.msra.mxu0 0.0
          %966 = vmatprep.subr.mxu0 0.0
          %967 = vmatpush1.msra.mxu0 0.0
          %968 = vmatprep.subr.mxu0 0.0
          %969 = vmatpush1.msra.mxu0 0.0
          %970 = vmatprep.subr.mxu0 0.0
          %971 = vmatpush1.msra.mxu0 0.0
          %972 = vmatprep.subr.mxu0 0.0
          %973 = vmatpush1.msra.mxu0 0.0
          %974 = vmatprep.subr.mxu0 0.0
          %975 = vmatpush1.msra.mxu0 0.0
          %976 = vmatprep.subr.mxu0 0.0
          %977 = vmatpush1.msra.mxu0 0.0
          %978 = vmatprep.subr.mxu0 0.0
          %979 = vmatpush1.msra.mxu0 0.0
          %980 = vmatprep.subr.mxu0 0.0
          %981 = vmatpush1.msra.mxu0 0.0
          %982 = vmatprep.subr.mxu0 0.0
          %983 = vmatpush1.msra.mxu0 0.0
          %984 = vmatprep.subr.mxu0 0.0
          %985 = vmatpush1.msra.mxu0 0.0
          %986 = vmatprep.subr.mxu0 0.0
          %987 = vmatpush1.msra.mxu0 0.0
          %988 = vmatprep.mubr.f32.mxu0 0.0
          %989 = vmatmul.mubr.f32.gmra.mrb[0].mxu0 %v919
          %v990 = vpop.f32.mrb[0].mxu0
          %v991 = vadd.f32 0.0, %v990
          %v992 = vpop.f32.mrb[0].mxu0
          %993 = vmatprep.mubr.f32.mxu0 0.0
          %994 = vmatmul.mubr.f32.gmra.mrb[0].mxu0 %v922
          %v995 = vpop.f32.mrb[0].mxu0
          %v996 = vadd.f32 0.0, %v995
          %v997 = vpop.f32.mrb[0].mxu0
          %998 = vdwg.mxu0
          %v999 = vadd.f32 %v833, %v910
          %v1000 = vadd.f32 %v834, %v915
          %v1001 = vadd.f32 %v835, %v991
          %v1002 = vadd.f32 %v836, %v996
          %1003 = vst.msk [vmem:[#allocation4] sm:$0xff] %vm589, %v999
          %1004 = vst.msk [vmem:[#allocation4 + $0x8] sm:$0xff] %vm589, %v1000
          %1005 = vst.msk [vmem:[#allocation4 + $0x10] sm:$0xff] %vm589, %v1001
          %1006 = vst.msk [vmem:[#allocation4 + $0x18] sm:$0xff] %vm589, %v1002
          %1007 = vst.msk [vmem:[#allocation2] sm:$0xff] %vm804, %v553
          %1008 = vst.msk [vmem:[#allocation2 + $0x8] sm:$0xff] %vm804, %v554
          %1009 = vst.msk [vmem:[#allocation2 + $0x10] sm:$0xff] %vm804, %v555
          %1010 = vst.msk [vmem:[#allocation2 + $0x18] sm:$0xff] %vm804, %v556
        $region56: #{tpu_custom_call.1} parent=39 // pred_fallthru
          _
        %p1011 = scmp.lt.s32.totalorder %s32, %s31
        // Predicated region
        $region57: #{tpu_custom_call.1} parent=39 // pred_check
          %p1012 = pneg %p1011
        $region58: #{tpu_custom_call.1} parent=39 // pred_check_branch
          %1014 = sbr.rel (%p1012) target = $region60
        $region59: #{tpu_custom_call.1} parent=39 // pred_region
          %v1015 = vld [vmem:[%s415] sm:$0xff]
          %v1016 = vld [vmem:[%s415 + $0x8] sm:$0xff]
          %v1017 = vld [vmem:[%s415 + $0x10] sm:$0xff]
          %v1018 = vld [vmem:[%s415 + $0x18] sm:$0xff]
          %v1019 = vld [vmem:[%s339] sm:$0xff]
          %v1020 = vld [vmem:[%s339 + $0x8] sm:$0xff]
          %v1021 = vld [vmem:[%s339 + $0x10] sm:$0xff]
          %v1022 = vld [vmem:[%s339 + $0x18] sm:$0xff]
          %v1023 = vld [vmem:[%s348] sm:$0xff]
          %v1024 = vld [vmem:[%s348 + $0x8] sm:$0xff]
          %v1025 = vld [vmem:[%s348 + $0x10] sm:$0xff]
          %v1026 = vld [vmem:[%s348 + $0x18] sm:$0xff]
          %v1027 = vld [vmem:[%s431] sm:$0xff]
          %v1028 = vld [vmem:[%s431 + $0x8] sm:$0xff]
          %v1029 = vld [vmem:[%s431 + $0x10] sm:$0xff]
          %v1030 = vld [vmem:[%s431 + $0x18] sm:$0xff]
          %v1031 = vld [vmem:[%s441] sm:$0x1]
          %v1032 = vld [vmem:[%s441 + $0x1] sm:$0x1]
          %1034 = vset.pattern.permute.xlu0 0
          %1035 = vperm.xlu0 %1034, %v1027
          %v1036 = vpop.permute.xlu0 %1035
          %1039 = vset.pattern.permute.xlu0 0
          %1040 = vperm.xlu0 %1039, %v1028
          %v1041 = vpop.permute.xlu0 %1040
          %1044 = vset.pattern.permute.xlu0 0
          %1045 = vperm.xlu0 %1044, %v1029
          %v1046 = vpop.permute.xlu0 %1045
          %1049 = vset.pattern.permute.xlu0 0
          %1050 = vperm.xlu0 %1049, %v1030
          %v1051 = vpop.permute.xlu0 %1050
          %v1055 = vlaneseq
          %v1056 = vshrl.u32 %v1055, 7
          %v1057 = vsub.s32 0, %v1056
          %v1058 = vrot.slane %v1031, %v1057
          %v1059 = vlaneseq
          %v1060 = vshrl.u32 %v1059, 7
          %v1061 = vsub.s32 0, %v1060
          %v1062 = vrot.slane %v1032, %v1061
          %v1065 = vadd.f32 %v1036, %v1058
          %v1066 = vadd.f32 %v1041, %v1058
          %v1067 = vadd.f32 %v1046, %v1062
          %v1068 = vadd.f32 %v1051, %v1062
          %v1069 = vld [vmem:[#allocation2] sm:$0xff]
          %v1070 = vld [vmem:[#allocation2 + $0x8] sm:$0xff]
          %v1071 = vld [vmem:[#allocation2 + $0x10] sm:$0xff]
          %v1072 = vld [vmem:[#allocation2 + $0x18] sm:$0xff]
          %vm1073 = vcmask 130048
          %v1074 = vsel %vm1073, %v1065, -inf
          %1075 = vmax.xlane.f32.xlu0 %v1074
          %v1076 = vpop.xlane.xlu0 %1075
          %v1077 = vsel %vm1073, %v1066, -inf
          %1078 = vmax.xlane.f32.xlu0 %v1077
          %v1079 = vpop.xlane.xlu0 %1078
          %v1080 = vsel %vm1073, %v1067, -inf
          %1081 = vmax.xlane.f32.xlu0 %v1080
          %v1082 = vpop.xlane.xlu0 %1081
          %v1083 = vsel %vm1073, %v1068, -inf
          %1084 = vmax.xlane.f32.xlu0 %v1083
          %v1085 = vpop.xlane.xlu0 %1084
          %v1086 = vmax.f32 %v1069, %v1076
          %v1087 = vmax.f32 %v1070, %v1079
          %v1088 = vmax.f32 %v1071, %v1082
          %v1089 = vmax.f32 %v1072, %v1085
          %1091 = vset.pattern.permute.xlu0 0
          %1092 = vperm.xlu0 %1091, %v1086
          %v1093 = vpop.permute.xlu0 %1092
          %1096 = vset.pattern.permute.xlu0 0
          %1097 = vperm.xlu0 %1096, %v1087
          %v1098 = vpop.permute.xlu0 %1097
          %1101 = vset.pattern.permute.xlu0 0
          %1102 = vperm.xlu0 %1101, %v1088
          %v1103 = vpop.permute.xlu0 %1102
          %1106 = vset.pattern.permute.xlu0 0
          %1107 = vperm.xlu0 %1106, %v1089
          %v1108 = vpop.permute.xlu0 %1107
          %v1110 = vsub.f32 %v1065, %v1093
          %v1111 = vsub.f32 %v1066, %v1098
          %v1112 = vsub.f32 %v1067, %v1103
          %v1113 = vsub.f32 %v1068, %v1108
          %v1114 = vmul.f32 %v1110, 1.442695
          %v1115 = vpow.pop %v1114
          %v1116 = vmul.f32 %v1111, 1.442695
          %v1117 = vpow.pop %v1116
          %v1118 = vmul.f32 %v1112, 1.442695
          %v1119 = vpow.pop %v1118
          %v1120 = vmul.f32 %v1113, 1.442695
          %v1121 = vpow.pop %v1120
          %vm1122 = vcmask 261120
          %v1124 = vsel %vm1122, %v1015, 0
          %v1127 = vsel %vm1122, %v1016, 0
          %v1130 = vsel %vm1122, %v1019, 0
          %v1133 = vsel %vm1122, %v1020, 0
          %1135 = vmatprep.subr.mxu0 0.0
          %1136 = vmatpush1.xpose.msra.mxu0 %v1130
          %1137 = vmatprep.subr.mxu0 0.0
          %1138 = vmatpush1.xpose.msra.mxu0 %v1133
          %1139 = vmatprep.subr.mxu0 0.0
          %1140 = vmatpush1.xpose.msra.mxu0 0.0
          %1141 = vmatprep.subr.mxu0 0.0
          %1142 = vmatpush1.xpose.msra.mxu0 0.0
          %1143 = vmatprep.subr.mxu0 0.0
          %1144 = vmatpush1.xpose.msra.mxu0 0.0
          %1145 = vmatprep.subr.mxu0 0.0
          %1146 = vmatpush1.xpose.msra.mxu0 0.0
          %1147 = vmatprep.subr.mxu0 0.0
          %1148 = vmatpush1.xpose.msra.mxu0 0.0
          %1149 = vmatprep.subr.mxu0 0.0
          %1150 = vmatpush1.xpose.msra.mxu0 0.0
          %1151 = vmatprep.subr.mxu0 0.0
          %1152 = vmatpush1.xpose.msra.mxu0 0.0
          %1153 = vmatprep.subr.mxu0 0.0
          %1154 = vmatpush1.xpose.msra.mxu0 0.0
          %1155 = vmatprep.subr.mxu0 0.0
          %1156 = vmatpush1.xpose.msra.mxu0 0.0
          %1157 = vmatprep.subr.mxu0 0.0
          %1158 = vmatpush1.xpose.msra.mxu0 0.0
          %1159 = vmatprep.subr.mxu0 0.0
          %1160 = vmatpush1.xpose.msra.mxu0 0.0
          %1161 = vmatprep.subr.mxu0 0.0
          %1162 = vmatpush1.xpose.msra.mxu0 0.0
          %1163 = vmatprep.subr.mxu0 0.0
          %1164 = vmatpush1.xpose.msra.mxu0 0.0
          %1165 = vmatprep.subr.mxu0 0.0
          %1166 = vmatpush1.xpose.msra.mxu0 0.0
          %1167 = vmatprep.subr.mxu0 0.0
          %1168 = vmatpush1.xpose.msra.mxu0 0.0
          %1169 = vmatprep.subr.mxu0 0.0
          %1170 = vmatpush1.xpose.msra.mxu0 0.0
          %1171 = vmatprep.subr.mxu0 0.0
          %1172 = vmatpush1.xpose.msra.mxu0 0.0
          %1173 = vmatprep.subr.mxu0 0.0
          %1174 = vmatpush1.xpose.msra.mxu0 0.0
          %1175 = vmatprep.subr.mxu0 0.0
          %1176 = vmatpush1.xpose.msra.mxu0 0.0
          %1177 = vmatprep.subr.mxu0 0.0
          %1178 = vmatpush1.xpose.msra.mxu0 0.0
          %1179 = vmatprep.subr.mxu0 0.0
          %1180 = vmatpush1.xpose.msra.mxu0 0.0
          %1181 = vmatprep.subr.mxu0 0.0
          %1182 = vmatpush1.xpose.msra.mxu0 0.0
          %1183 = vmatprep.subr.mxu0 0.0
          %1184 = vmatpush1.xpose.msra.mxu0 0.0
          %1185 = vmatprep.subr.mxu0 0.0
          %1186 = vmatpush1.xpose.msra.mxu0 0.0
          %1187 = vmatprep.subr.mxu0 0.0
          %1188 = vmatpush1.xpose.msra.mxu0 0.0
          %1189 = vmatprep.subr.mxu0 0.0
          %1190 = vmatpush1.xpose.msra.mxu0 0.0
          %1191 = vmatprep.subr.mxu0 0.0
          %1192 = vmatpush1.xpose.msra.mxu0 0.0
          %1193 = vmatprep.subr.mxu0 0.0
          %1194 = vmatpush1.xpose.msra.mxu0 0.0
          %1195 = vmatprep.subr.mxu0 0.0
          %1196 = vmatpush1.xpose.msra.mxu0 0.0
          %1197 = vmatprep.subr.mxu0 0.0
          %1198 = vmatpush1.xpose.msra.mxu0 0.0
          %1199 = vmatprep.mubr.f32.mxu0 0.0
          %1200 = vmatmul.mubr.f32.gmra.mrb[0].mxu0 %v1124
          %v1201 = vpop.f32.mrb[0].mxu0
          %v1202 = vadd.f32 0.0, %v1201
          %v1203 = vpop.f32.mrb[0].mxu0
          %1204 = vmatprep.mubr.f32.mxu0 0.0
          %1205 = vmatmul.mubr.f32.gmra.mrb[0].mxu0 %v1127
          %v1206 = vpop.f32.mrb[0].mxu0
          %v1207 = vadd.f32 0.0, %v1206
          %v1208 = vpop.f32.mrb[0].mxu0
          %1209 = vdwg.mxu0
          %v1211 = vsel %vm1122, %v1017, 0
          %v1214 = vsel %vm1122, %v1018, 0
          %v1217 = vsel %vm1122, %v1021, 0
          %v1220 = vsel %vm1122, %v1022, 0
          %1222 = vmatprep.subr.mxu0 0.0
          %1223 = vmatpush1.xpose.msra.mxu0 %v1217
          %1224 = vmatprep.subr.mxu0 0.0
          %1225 = vmatpush1.xpose.msra.mxu0 %v1220
          %1226 = vmatprep.subr.mxu0 0.0
          %1227 = vmatpush1.xpose.msra.mxu0 0.0
          %1228 = vmatprep.subr.mxu0 0.0
          %1229 = vmatpush1.xpose.msra.mxu0 0.0
          %1230 = vmatprep.subr.mxu0 0.0
          %1231 = vmatpush1.xpose.msra.mxu0 0.0
          %1232 = vmatprep.subr.mxu0 0.0
          %1233 = vmatpush1.xpose.msra.mxu0 0.0
          %1234 = vmatprep.subr.mxu0 0.0
          %1235 = vmatpush1.xpose.msra.mxu0 0.0
          %1236 = vmatprep.subr.mxu0 0.0
          %1237 = vmatpush1.xpose.msra.mxu0 0.0
          %1238 = vmatprep.subr.mxu0 0.0
          %1239 = vmatpush1.xpose.msra.mxu0 0.0
          %1240 = vmatprep.subr.mxu0 0.0
          %1241 = vmatpush1.xpose.msra.mxu0 0.0
          %1242 = vmatprep.subr.mxu0 0.0
          %1243 = vmatpush1.xpose.msra.mxu0 0.0
          %1244 = vmatprep.subr.mxu0 0.0
          %1245 = vmatpush1.xpose.msra.mxu0 0.0
          %1246 = vmatprep.subr.mxu0 0.0
          %1247 = vmatpush1.xpose.msra.mxu0 0.0
          %1248 = vmatprep.subr.mxu0 0.0
          %1249 = vmatpush1.xpose.msra.mxu0 0.0
          %1250 = vmatprep.subr.mxu0 0.0
          %1251 = vmatpush1.xpose.msra.mxu0 0.0
          %1252 = vmatprep.subr.mxu0 0.0
          %1253 = vmatpush1.xpose.msra.mxu0 0.0
          %1254 = vmatprep.subr.mxu0 0.0
          %1255 = vmatpush1.xpose.msra.mxu0 0.0
          %1256 = vmatprep.subr.mxu0 0.0
          %1257 = vmatpush1.xpose.msra.mxu0 0.0
          %1258 = vmatprep.subr.mxu0 0.0
          %1259 = vmatpush1.xpose.msra.mxu0 0.0
          %1260 = vmatprep.subr.mxu0 0.0
          %1261 = vmatpush1.xpose.msra.mxu0 0.0
          %1262 = vmatprep.subr.mxu0 0.0
          %1263 = vmatpush1.xpose.msra.mxu0 0.0
          %1264 = vmatprep.subr.mxu0 0.0
          %1265 = vmatpush1.xpose.msra.mxu0 0.0
          %1266 = vmatprep.subr.mxu0 0.0
          %1267 = vmatpush1.xpose.msra.mxu0 0.0
          %1268 = vmatprep.subr.mxu0 0.0
          %1269 = vmatpush1.xpose.msra.mxu0 0.0
          %1270 = vmatprep.subr.mxu0 0.0
          %1271 = vmatpush1.xpose.msra.mxu0 0.0
          %1272 = vmatprep.subr.mxu0 0.0
          %1273 = vmatpush1.xpose.msra.mxu0 0.0
          %1274 = vmatprep.subr.mxu0 0.0
          %1275 = vmatpush1.xpose.msra.mxu0 0.0
          %1276 = vmatprep.subr.mxu0 0.0
          %1277 = vmatpush1.xpose.msra.mxu0 0.0
          %1278 = vmatprep.subr.mxu0 0.0
          %1279 = vmatpush1.xpose.msra.mxu0 0.0
          %1280 = vmatprep.subr.mxu0 0.0
          %1281 = vmatpush1.xpose.msra.mxu0 0.0
          %1282 = vmatprep.subr.mxu0 0.0
          %1283 = vmatpush1.xpose.msra.mxu0 0.0
          %1284 = vmatprep.subr.mxu0 0.0
          %1285 = vmatpush1.xpose.msra.mxu0 0.0
          %1286 = vmatprep.mubr.f32.mxu0 0.0
          %1287 = vmatmul.mubr.f32.gmra.mrb[0].mxu0 %v1211
          %v1288 = vpop.f32.mrb[0].mxu0
          %v1289 = vadd.f32 0.0, %v1288
          %v1290 = vpop.f32.mrb[0].mxu0
          %1291 = vmatprep.mubr.f32.mxu0 0.0
          %1292 = vmatmul.mubr.f32.gmra.mrb[0].mxu0 %v1214
          %v1293 = vpop.f32.mrb[0].mxu0
          %v1294 = vadd.f32 0.0, %v1293
          %v1295 = vpop.f32.mrb[0].mxu0
          %1296 = vdwg.mxu0
          %v1297 = vmul.f32 %v1202, %v1115
          %v1298 = vmul.f32 %v1207, %v1117
          %v1299 = vmul.f32 %v1289, %v1119
          %v1300 = vmul.f32 %v1294, %v1121
          %v1301 = vsub.f32 %v1069, %v1086
          %v1302 = vsub.f32 %v1070, %v1087
          %v1303 = vsub.f32 %v1071, %v1088
          %v1304 = vsub.f32 %v1072, %v1089
          %v1305 = vmul.f32 %v1301, 1.442695
          %v1306 = vpow.pop %v1305
          %v1307 = vmul.f32 %v1302, 1.442695
          %v1308 = vpow.pop %v1307
          %v1309 = vmul.f32 %v1303, 1.442695
          %v1310 = vpow.pop %v1309
          %v1311 = vmul.f32 %v1304, 1.442695
          %v1312 = vpow.pop %v1311
          %v1313 = vld [vmem:[#allocation3] sm:$0xff]
          %v1314 = vld [vmem:[#allocation3 + $0x8] sm:$0xff]
          %v1315 = vld [vmem:[#allocation3 + $0x10] sm:$0xff]
          %v1316 = vld [vmem:[#allocation3 + $0x18] sm:$0xff]
          %v1317 = vmul.f32 %v1306, %v1313
          %v1318 = vmul.f32 %v1308, %v1314
          %v1319 = vmul.f32 %v1310, %v1315
          %v1320 = vmul.f32 %v1312, %v1316
          %v1321 = vsel %vm1073, %v1297, 0.0
          %1322 = vadd.xlane.f32.xlu0 %v1321
          %v1323 = vpop.xlane.xlu0 %1322
          %v1324 = vsel %vm1073, %v1298, 0.0
          %1325 = vadd.xlane.f32.xlu0 %v1324
          %v1326 = vpop.xlane.xlu0 %1325
          %v1327 = vsel %vm1073, %v1299, 0.0
          %1328 = vadd.xlane.f32.xlu0 %v1327
          %v1329 = vpop.xlane.xlu0 %1328
          %v1330 = vsel %vm1073, %v1300, 0.0
          %1331 = vadd.xlane.f32.xlu0 %v1330
          %v1332 = vpop.xlane.xlu0 %1331
          %v1333 = vadd.f32 %v1317, %v1323
          %v1334 = vadd.f32 %v1318, %v1326
          %v1335 = vadd.f32 %v1319, %v1329
          %v1336 = vadd.f32 %v1320, %v1332
          %vm1337 = vcmask 7168
          %1338 = vst.msk [vmem:[#allocation3] sm:$0xff] %vm1337, %v1333
          %1339 = vst.msk [vmem:[#allocation3 + $0x8] sm:$0xff] %vm1337, %v1334
          %1340 = vst.msk [vmem:[#allocation3 + $0x10] sm:$0xff] %vm1337, %v1335
          %1341 = vst.msk [vmem:[#allocation3 + $0x18] sm:$0xff] %vm1337, %v1336
          %v1342 = vld [vmem:[#allocation4] sm:$0xff]
          %v1343 = vld [vmem:[#allocation4 + $0x8] sm:$0xff]
          %v1344 = vld [vmem:[#allocation4 + $0x10] sm:$0xff]
          %v1345 = vld [vmem:[#allocation4 + $0x18] sm:$0xff]
          %1347 = vset.pattern.permute.xlu0 0
          %1348 = vperm.xlu0 %1347, %v1306
          %v1349 = vpop.permute.xlu0 %1348
          %1352 = vset.pattern.permute.xlu0 0
          %1353 = vperm.xlu0 %1352, %v1308
          %v1354 = vpop.permute.xlu0 %1353
          %1357 = vset.pattern.permute.xlu0 0
          %1358 = vperm.xlu0 %1357, %v1310
          %v1359 = vpop.permute.xlu0 %1358
          %1362 = vset.pattern.permute.xlu0 0
          %1363 = vperm.xlu0 %1362, %v1312
          %v1364 = vpop.permute.xlu0 %1363
          %v1366 = vmul.f32 %v1349, %v1342
          %v1367 = vmul.f32 %v1354, %v1343
          %v1368 = vmul.f32 %v1359, %v1344
          %v1369 = vmul.f32 %v1364, %v1345
          %v1371 = vsel %vm1073, %v1297, 0
          %v1374 = vsel %vm1073, %v1298, 0
          %1376 = vmatprep.subr.mxu0 0.0
          %1377 = vmatpush1.msra.mxu0 %v1023
          %1378 = vmatprep.subr.mxu0 0.0
          %1379 = vmatpush1.msra.mxu0 %v1024
          %1380 = vmatprep.subr.mxu0 0.0
          %1381 = vmatpush1.msra.mxu0 0.0
          %1382 = vmatprep.subr.mxu0 0.0
          %1383 = vmatpush1.msra.mxu0 0.0
          %1384 = vmatprep.subr.mxu0 0.0
          %1385 = vmatpush1.msra.mxu0 0.0
          %1386 = vmatprep.subr.mxu0 0.0
          %1387 = vmatpush1.msra.mxu0 0.0
          %1388 = vmatprep.subr.mxu0 0.0
          %1389 = vmatpush1.msra.mxu0 0.0
          %1390 = vmatprep.subr.mxu0 0.0
          %1391 = vmatpush1.msra.mxu0 0.0
          %1392 = vmatprep.subr.mxu0 0.0
          %1393 = vmatpush1.msra.mxu0 0.0
          %1394 = vmatprep.subr.mxu0 0.0
          %1395 = vmatpush1.msra.mxu0 0.0
          %1396 = vmatprep.subr.mxu0 0.0
          %1397 = vmatpush1.msra.mxu0 0.0
          %1398 = vmatprep.subr.mxu0 0.0
          %1399 = vmatpush1.msra.mxu0 0.0
          %1400 = vmatprep.subr.mxu0 0.0
          %1401 = vmatpush1.msra.mxu0 0.0
          %1402 = vmatprep.subr.mxu0 0.0
          %1403 = vmatpush1.msra.mxu0 0.0
          %1404 = vmatprep.subr.mxu0 0.0
          %1405 = vmatpush1.msra.mxu0 0.0
          %1406 = vmatprep.subr.mxu0 0.0
          %1407 = vmatpush1.msra.mxu0 0.0
          %1408 = vmatprep.subr.mxu0 0.0
          %1409 = vmatpush1.msra.mxu0 0.0
          %1410 = vmatprep.subr.mxu0 0.0
          %1411 = vmatpush1.msra.mxu0 0.0
          %1412 = vmatprep.subr.mxu0 0.0
          %1413 = vmatpush1.msra.mxu0 0.0
          %1414 = vmatprep.subr.mxu0 0.0
          %1415 = vmatpush1.msra.mxu0 0.0
          %1416 = vmatprep.subr.mxu0 0.0
          %1417 = vmatpush1.msra.mxu0 0.0
          %1418 = vmatprep.subr.mxu0 0.0
          %1419 = vmatpush1.msra.mxu0 0.0
          %1420 = vmatprep.subr.mxu0 0.0
          %1421 = vmatpush1.msra.mxu0 0.0
          %1422 = vmatprep.subr.mxu0 0.0
          %1423 = vmatpush1.msra.mxu0 0.0
          %1424 = vmatprep.subr.mxu0 0.0
          %1425 = vmatpush1.msra.mxu0 0.0
          %1426 = vmatprep.subr.mxu0 0.0
          %1427 = vmatpush1.msra.mxu0 0.0
          %1428 = vmatprep.subr.mxu0 0.0
          %1429 = vmatpush1.msra.mxu0 0.0
          %1430 = vmatprep.subr.mxu0 0.0
          %1431 = vmatpush1.msra.mxu0 0.0
          %1432 = vmatprep.subr.mxu0 0.0
          %1433 = vmatpush1.msra.mxu0 0.0
          %1434 = vmatprep.subr.mxu0 0.0
          %1435 = vmatpush1.msra.mxu0 0.0
          %1436 = vmatprep.subr.mxu0 0.0
          %1437 = vmatpush1.msra.mxu0 0.0
          %1438 = vmatprep.subr.mxu0 0.0
          %1439 = vmatpush1.msra.mxu0 0.0
          %1440 = vmatprep.mubr.f32.mxu0 0.0
          %1441 = vmatmul.mubr.f32.gmra.mrb[0].mxu0 %v1371
          %v1442 = vpop.f32.mrb[0].mxu0
          %v1443 = vadd.f32 0.0, %v1442
          %v1444 = vpop.f32.mrb[0].mxu0
          %1445 = vmatprep.mubr.f32.mxu0 0.0
          %1446 = vmatmul.mubr.f32.gmra.mrb[0].mxu0 %v1374
          %v1447 = vpop.f32.mrb[0].mxu0
          %v1448 = vadd.f32 0.0, %v1447
          %v1449 = vpop.f32.mrb[0].mxu0
          %1450 = vdwg.mxu0
          %v1452 = vsel %vm1073, %v1299, 0
          %v1455 = vsel %vm1073, %v1300, 0
          %1457 = vmatprep.subr.mxu0 0.0
          %1458 = vmatpush1.msra.mxu0 %v1025
          %1459 = vmatprep.subr.mxu0 0.0
          %1460 = vmatpush1.msra.mxu0 %v1026
          %1461 = vmatprep.subr.mxu0 0.0
          %1462 = vmatpush1.msra.mxu0 0.0
          %1463 = vmatprep.subr.mxu0 0.0
          %1464 = vmatpush1.msra.mxu0 0.0
          %1465 = vmatprep.subr.mxu0 0.0
          %1466 = vmatpush1.msra.mxu0 0.0
          %1467 = vmatprep.subr.mxu0 0.0
          %1468 = vmatpush1.msra.mxu0 0.0
          %1469 = vmatprep.subr.mxu0 0.0
          %1470 = vmatpush1.msra.mxu0 0.0
          %1471 = vmatprep.subr.mxu0 0.0
          %1472 = vmatpush1.msra.mxu0 0.0
          %1473 = vmatprep.subr.mxu0 0.0
          %1474 = vmatpush1.msra.mxu0 0.0
          %1475 = vmatprep.subr.mxu0 0.0
          %1476 = vmatpush1.msra.mxu0 0.0
          %1477 = vmatprep.subr.mxu0 0.0
          %1478 = vmatpush1.msra.mxu0 0.0
          %1479 = vmatprep.subr.mxu0 0.0
          %1480 = vmatpush1.msra.mxu0 0.0
          %1481 = vmatprep.subr.mxu0 0.0
          %1482 = vmatpush1.msra.mxu0 0.0
          %1483 = vmatprep.subr.mxu0 0.0
          %1484 = vmatpush1.msra.mxu0 0.0
          %1485 = vmatprep.subr.mxu0 0.0
          %1486 = vmatpush1.msra.mxu0 0.0
          %1487 = vmatprep.subr.mxu0 0.0
          %1488 = vmatpush1.msra.mxu0 0.0
          %1489 = vmatprep.subr.mxu0 0.0
          %1490 = vmatpush1.msra.mxu0 0.0
          %1491 = vmatprep.subr.mxu0 0.0
          %1492 = vmatpush1.msra.mxu0 0.0
          %1493 = vmatprep.subr.mxu0 0.0
          %1494 = vmatpush1.msra.mxu0 0.0
          %1495 = vmatprep.subr.mxu0 0.0
          %1496 = vmatpush1.msra.mxu0 0.0
          %1497 = vmatprep.subr.mxu0 0.0
          %1498 = vmatpush1.msra.mxu0 0.0
          %1499 = vmatprep.subr.mxu0 0.0
          %1500 = vmatpush1.msra.mxu0 0.0
          %1501 = vmatprep.subr.mxu0 0.0
          %1502 = vmatpush1.msra.mxu0 0.0
          %1503 = vmatprep.subr.mxu0 0.0
          %1504 = vmatpush1.msra.mxu0 0.0
          %1505 = vmatprep.subr.mxu0 0.0
          %1506 = vmatpush1.msra.mxu0 0.0
          %1507 = vmatprep.subr.mxu0 0.0
          %1508 = vmatpush1.msra.mxu0 0.0
          %1509 = vmatprep.subr.mxu0 0.0
          %1510 = vmatpush1.msra.mxu0 0.0
          %1511 = vmatprep.subr.mxu0 0.0
          %1512 = vmatpush1.msra.mxu0 0.0
          %1513 = vmatprep.subr.mxu0 0.0
          %1514 = vmatpush1.msra.mxu0 0.0
          %1515 = vmatprep.subr.mxu0 0.0
          %1516 = vmatpush1.msra.mxu0 0.0
          %1517 = vmatprep.subr.mxu0 0.0
          %1518 = vmatpush1.msra.mxu0 0.0
          %1519 = vmatprep.subr.mxu0 0.0
          %1520 = vmatpush1.msra.mxu0 0.0
          %1521 = vmatprep.mubr.f32.mxu0 0.0
          %1522 = vmatmul.mubr.f32.gmra.mrb[0].mxu0 %v1452
          %v1523 = vpop.f32.mrb[0].mxu0
          %v1524 = vadd.f32 0.0, %v1523
          %v1525 = vpop.f32.mrb[0].mxu0
          %1526 = vmatprep.mubr.f32.mxu0 0.0
          %1527 = vmatmul.mubr.f32.gmra.mrb[0].mxu0 %v1455
          %v1528 = vpop.f32.mrb[0].mxu0
          %v1529 = vadd.f32 0.0, %v1528
          %v1530 = vpop.f32.mrb[0].mxu0
          %1531 = vdwg.mxu0
          %v1532 = vadd.f32 %v1366, %v1443
          %v1533 = vadd.f32 %v1367, %v1448
          %v1534 = vadd.f32 %v1368, %v1524
          %v1535 = vadd.f32 %v1369, %v1529
          %1536 = vst.msk [vmem:[#allocation4] sm:$0xff] %vm1122, %v1532
          %1537 = vst.msk [vmem:[#allocation4 + $0x8] sm:$0xff] %vm1122, %v1533
          %1538 = vst.msk [vmem:[#allocation4 + $0x10] sm:$0xff] %vm1122, %v1534
          %1539 = vst.msk [vmem:[#allocation4 + $0x18] sm:$0xff] %vm1122, %v1535
          %1540 = vst.msk [vmem:[#allocation2] sm:$0xff] %vm1337, %v1086
          %1541 = vst.msk [vmem:[#allocation2 + $0x8] sm:$0xff] %vm1337, %v1087
          %1542 = vst.msk [vmem:[#allocation2 + $0x10] sm:$0xff] %vm1337, %v1088
          %1543 = vst.msk [vmem:[#allocation2 + $0x18] sm:$0xff] %vm1337, %v1089
        $region60: #{tpu_custom_call.1} parent=39 // pred_fallthru
          _
        // Predicated region
        $region61: #{tpu_custom_call.1} parent=39 // pred_check
          %p1544 = pneg %p445
        $region62: #{tpu_custom_call.1} parent=39 // pred_check_branch
          %1546 = sbr.rel (%p1544) target = $region64
        $region63: #{tpu_custom_call.1} parent=39 // pred_region
          %v1547 = vld [vmem:[#allocation2] sm:$0xff]
          %v1548 = vld [vmem:[#allocation2 + $0x8] sm:$0xff]
          %v1549 = vld [vmem:[#allocation2 + $0x10] sm:$0xff]
          %v1550 = vld [vmem:[#allocation2 + $0x18] sm:$0xff]
          %v1551 = vld [vmem:[#allocation3] sm:$0xff]
          %v1552 = vld [vmem:[#allocation3 + $0x8] sm:$0xff]
          %v1553 = vld [vmem:[#allocation3 + $0x10] sm:$0xff]
          %v1554 = vld [vmem:[#allocation3 + $0x18] sm:$0xff]
          %v1555 = vand.u32 2147483647, %v1551
          %v1556 = vand.u32 2147483647, %v1552
          %v1557 = vand.u32 2147483647, %v1553
          %v1558 = vand.u32 2147483647, %v1554
          %v1559 = vsub.f32 0.0, %v1547
          %v1560 = vsub.f32 0.0, %v1548
          %v1561 = vsub.f32 0.0, %v1549
          %v1562 = vsub.f32 0.0, %v1550
          %v1563 = vmul.f32 %v1559, 1.442695
          %v1564 = vpow.pop %v1563
          %v1565 = vmul.f32 %v1560, 1.442695
          %v1566 = vpow.pop %v1565
          %v1567 = vmul.f32 %v1561, 1.442695
          %v1568 = vpow.pop %v1567
          %v1569 = vmul.f32 %v1562, 1.442695
          %v1570 = vpow.pop %v1569
          %v1571 = vmax.f32 %v1555, %v1564
          %v1572 = vmax.f32 %v1556, %v1566
          %v1573 = vmax.f32 %v1557, %v1568
          %v1574 = vmax.f32 %v1558, %v1570
          %v1575 = vadd.f32 %v1571, 1e-06
          %v1576 = vadd.f32 %v1572, 1e-06
          %v1577 = vadd.f32 %v1573, 1e-06
          %v1578 = vadd.f32 %v1574, 1e-06
          %v1579 = vrcp.pop %v1575
          %v1580 = vrcp.pop %v1576
          %v1581 = vrcp.pop %v1577
          %v1582 = vrcp.pop %v1578
          %v1583 = vld [vmem:[#allocation4] sm:$0xff]
          %v1584 = vld [vmem:[#allocation4 + $0x8] sm:$0xff]
          %v1585 = vld [vmem:[#allocation4 + $0x10] sm:$0xff]
          %v1586 = vld [vmem:[#allocation4 + $0x18] sm:$0xff]
          %1588 = vset.pattern.permute.xlu0 0
          %1589 = vperm.xlu0 %1588, %v1579
          %v1590 = vpop.permute.xlu0 %1589
          %1593 = vset.pattern.permute.xlu0 0
          %1594 = vperm.xlu0 %1593, %v1580
          %v1595 = vpop.permute.xlu0 %1594
          %1598 = vset.pattern.permute.xlu0 0
          %1599 = vperm.xlu0 %1598, %v1581
          %v1600 = vpop.permute.xlu0 %1599
          %1603 = vset.pattern.permute.xlu0 0
          %1604 = vperm.xlu0 %1603, %v1582
          %v1605 = vpop.permute.xlu0 %1604
          %v1607 = vmul.f32 %v1583, %v1590
          %v1608 = vmul.f32 %v1584, %v1595
          %v1609 = vmul.f32 %v1585, %v1600
          %v1610 = vmul.f32 %v1586, %v1605
          %vm1611 = vcmask 261120
          %v1612 = vsel %vm1611, %v1607, 0.0
          %1613 = vadd.xlane.f32.xlu0 %v1612
          %v1614 = vpop.xlane.xlu0 %1613
          %v1615 = vsel %vm1611, %v1608, 0.0
          %1616 = vadd.xlane.f32.xlu0 %v1615
          %v1617 = vpop.xlane.xlu0 %1616
          %v1618 = vsel %vm1611, %v1609, 0.0
          %1619 = vadd.xlane.f32.xlu0 %v1618
          %v1620 = vpop.xlane.xlu0 %1619
          %v1621 = vsel %vm1611, %v1610, 0.0
          %1622 = vadd.xlane.f32.xlu0 %v1621
          %v1623 = vpop.xlane.xlu0 %1622
          %v1624 = vrcp.pop 32.0
          %v1625 = vmul.f32 %v1614, %v1624
          %v1626 = vmul.f32 %v1617, %v1624
          %v1627 = vmul.f32 %v1620, %v1624
          %v1628 = vmul.f32 %v1623, %v1624
          %v1629 = vsub.f32 %v1607, %v1625
          %v1630 = vsub.f32 %v1608, %v1626
          %v1631 = vsub.f32 %v1609, %v1627
          %v1632 = vsub.f32 %v1610, %v1628
          %v1633 = vmul.f32 %v1629, %v1629
          %v1634 = vmul.f32 %v1630, %v1630
          %v1635 = vmul.f32 %v1631, %v1631
          %v1636 = vmul.f32 %v1632, %v1632
          %v1637 = vsel %vm1611, %v1633, 0.0
          %1638 = vadd.xlane.f32.xlu0 %v1637
          %v1639 = vpop.xlane.xlu0 %1638
          %v1640 = vsel %vm1611, %v1634, 0.0
          %1641 = vadd.xlane.f32.xlu0 %v1640
          %v1642 = vpop.xlane.xlu0 %1641
          %v1643 = vsel %vm1611, %v1635, 0.0
          %1644 = vadd.xlane.f32.xlu0 %v1643
          %v1645 = vpop.xlane.xlu0 %1644
          %v1646 = vsel %vm1611, %v1636, 0.0
          %1647 = vadd.xlane.f32.xlu0 %v1646
          %v1648 = vpop.xlane.xlu0 %1647
          %v1649 = vmul.f32 %v1639, %v1624
          %v1650 = vmul.f32 %v1642, %v1624
          %v1651 = vmul.f32 %v1645, %v1624
          %v1652 = vmul.f32 %v1648, %v1624
          %v1653 = vadd.f32 %v1649, 1e-05
          %v1654 = vadd.f32 %v1650, 1e-05
          %v1655 = vadd.f32 %v1651, 1e-05
          %v1656 = vadd.f32 %v1652, 1e-05
          %v1657 = vrsqrt.pop %v1653
          %v1658 = vrsqrt.pop %v1654
          %v1659 = vrsqrt.pop %v1655
          %v1660 = vrsqrt.pop %v1656
          %v1661 = vmul.f32 %v1629, %v1657
          %v1662 = vmul.f32 %v1630, %v1658
          %v1663 = vmul.f32 %v1631, %v1659
          %v1664 = vmul.f32 %v1632, %v1660
          %1667 = vrot.lane.b32.xlu0 %v1663, 32
          %v1668 = vpop.permute.xlu0 %1667
          %1669 = vrot.lane.b32.xlu0 %v1664, 32
          %v1670 = vpop.permute.xlu0 %1669
          %v1673 = vsel %vm1611, %v1661, %v1668
          %v1674 = vsel %vm1611, %v1662, %v1670
          %vm1675 = vcmask 523264
          %1676 = vst.msk [vmem:[%s406] sm:$0xff] %vm1675, %v1673
          %1677 = vst.msk [vmem:[%s406 + $0x8] sm:$0xff] %vm1675, %v1674
        $region64: #{tpu_custom_call.1} parent=39 // pred_fallthru
          _
        %s1678 = sand.u32 %s206, 1
        %s1679 = scalar_lea.sflag [#allocation7], %s1678
        %s1680 = sand.u32 %s206, 1
        %s1681 = smul.addr %s1680, 16
        %s1682 = scalar_lea.vmem [#allocation10], %s1681
        // Predicated region
        $region65: #{tpu_custom_call.1} parent=39 // pred_check
          %p1683 = pneg %p216
        $region66: #{tpu_custom_call.1} parent=39 // pred_check_branch
          %1685 = sbr.rel (%p1683) target = $region68
        $region67: #{tpu_custom_call.1} parent=39 // pred_region
          %s1686 = smul.u32 2, %s31
          %s1688 = ssub.s32 256, 256
          %1689 = vsyncadd %s1679, %s1688
          %s1690 = smul.addr %s30, 2
          %s1691 = sadd.s32 %s1686, %s1690
          %s1692 = smul.addr %s1691, 128
          %s1693 = scalar_lea.hbm %s5, %s1692
          %s1694 = sshll.u32 %s1682, 4
          %s1695 = int_to_ptr.vmem [resolvable:$true] %s1694
          %1700 = dma.vmem_to_hbm [thread:$0]  %s1695, 256, %s1693, %s1679, 128, 128, 8
        $region68: #{tpu_custom_call.1} parent=39 // pred_fallthru
          _
      $region40: #{tpu_custom_call.1} parent=5 // pred_fallthru
        _
      %p1701 = scmp.le.s32.totalorder 2, %s20
      // Predicated region
      $region69: #{tpu_custom_call.1} parent=5 // pred_check
        %p1702 = pneg %p1701
      $region70: #{tpu_custom_call.1} parent=5 // pred_check_branch
        %1704 = sbr.rel (%p1702) target = $region72
      $region71: #{tpu_custom_call.1} parent=5 // pred_region
        %s1705 = ssub.s32 %s20, 2
        // Predicated region
        $region73: #{tpu_custom_call.1} parent=71 // pred_check
          %p1706 = pneg %p222
        $region74: #{tpu_custom_call.1} parent=71 // pred_check_branch
          %1708 = sbr.rel (%p1706) target = $region76
        $region75: #{tpu_custom_call.1} parent=71 // pred_region
          %s1709 = sand.u32 %s207, 1
          %s1710 = scalar_lea.sflag [#allocation7], %s1709
          %s1711 = sand.u32 %s207, 1
          %s1712 = smul.addr %s1711, 16
          %s1713 = scalar_lea.vmem [#allocation10], %s1712
          %1714 = dma.done %s1710, 256
        $region76: #{tpu_custom_call.1} parent=71 // pred_fallthru
          _
      $region72: #{tpu_custom_call.1} parent=5 // pred_fallthru
        _
    $region6: #{tpu_custom_call.1} parent=1 // loop_footer
      %s24 = sadd.s32 1, %s20
    $region7: #{tpu_custom_call.1} parent=1 // loop_footer_branch
      %19 = sbr.rel target = $region3
    $region8: #{tpu_custom_call.1} parent=1 // loop_exit
      _
    %1715 = vsyncpa [#allocation6], 1
    %s1716 = scalar_lea.sflag [#allocation6], 1
    %1717 = vsyncpa %s1716, 1
    %1718 = vsyncpa [#allocation9], 1
    %s1719 = scalar_lea.sflag [#allocation9], 1
    %1720 = vsyncpa %s1719, 1
    %1721 = vsyncpa [#allocation7], 1
    %s1722 = scalar_lea.sflag [#allocation7], 1
    %1723 = vsyncpa %s1722, 1

</llo_original>
